<compile_context>
chip_gen: v5e
topology: v5e:2x2
jax: 0.10.0
libtpu: 0.0.40
codegen_flags: <defaults>
</compile_context>

<pallas_src>
import jax
import jax.numpy as jnp
from jax import lax
from jax.experimental import pallas as pl
from jax.experimental.pallas import tpu as pltpu


_SINGLE_STEP_MAX = 1024   # max rows handled as one grid step (vreg-pressure cap)
_TILE_B = 512             # batch tile when tiling is actually needed


def _linear_T(a, w):
    """a: (rows, in), w: (out, in)  ->  (rows, out)  ==  a @ w.T  (f32 acc)."""
    return lax.dot_general(a, w, (((1,), (1,)), ((), ())),
                           preferred_element_type=jnp.float32)


def _mlp_kernel(x_ref,
                w_first_ref, b_first_ref,
                w_h0_ref, b_h0_ref,
                w_h1_ref, b_h1_ref,
                w_h2_ref, b_h2_ref,
                w_last_ref, b_last_ref,
                o_ref):
    """Whole forward pass for one (tile_b, Ni) batch tile, fused in VMEM."""
    x = x_ref[...].astype(jnp.float32)                       # (tb, Ni)

    # fc_first
    h = _linear_T(x, w_first_ref[...]) + b_first_ref[...]    # (tb, Nh)
    h0 = h                                                    # residual tap

    # 3 x (ReLU -> Linear(Nh, Nh))
    for w_ref, b_ref in ((w_h0_ref, b_h0_ref),
                         (w_h1_ref, b_h1_ref),
                         (w_h2_ref, b_h2_ref)):
        h = jnp.maximum(h, 0.0)
        h = _linear_T(h, w_ref[...]) + b_ref[...]

    # residual add + final ReLU
    h = jnp.maximum(h0 + h, 0.0)

    # fc_last
    y = _linear_T(h, w_last_ref[...]) + b_last_ref[...]       # (tb, No)
    o_ref[...] = y.astype(o_ref.dtype)


def _round_up(a, b):
    return (a + b - 1) // b * b


@jax.jit
def conditional_transform(x, params):
    """x: (B, Ni).  params: PyTorch-layout (out, in) weights, biases (out,) or (out, 1).

    Returns (B, No) matching the PyTorch module forward.
    """
    B, Ni = x.shape
    Nh = params["w_first"].shape[0]
    No = params["w_last"].shape[0]

    def bias2d(b):  # accept (out,), (out, 1) or (1, out)
        return jnp.reshape(b, (1, -1)).astype(jnp.float32)

    # Tiling: one grid step (no padding, block == full array) unless the batch
    # is large enough that vreg/VMEM pressure makes tiling worthwhile.
    if B <= _SINGLE_STEP_MAX:
        tb, num_tiles, B_pad = B, 1, B
    else:
        tb = _TILE_B
        B_pad = _round_up(B, tb)
        num_tiles = B_pad // tb

    x_p = x if B_pad == B else jnp.pad(x, ((0, B_pad - B), (0, 0)))

    def rep(shape):  # grid-invariant parameter: stays resident in VMEM
        return pl.BlockSpec(shape, lambda i: (0, 0))

    flops = 2 * B_pad * (Ni * Nh + 3 * Nh * Nh + Nh * No)
    param_bytes = 4 * (Ni * Nh + 3 * Nh * Nh + Nh * No + 4 * Nh + No)
    cost = pl.CostEstimate(
        flops=flops,
        transcendentals=0,
        bytes_accessed=4 * B_pad * (Ni + No) + param_bytes,
    )

    y = pl.pallas_call(
        _mlp_kernel,
        out_shape=jax.ShapeDtypeStruct((B_pad, No), x.dtype),
        grid=(num_tiles,),
        in_specs=[
            pl.BlockSpec((tb, Ni), lambda i: (i, 0)),        # x batch tile
            rep((Nh, Ni)), rep((1, Nh)),                     # fc_first
            rep((Nh, Nh)), rep((1, Nh)),                     # hidden 0
            rep((Nh, Nh)), rep((1, Nh)),                     # hidden 1
            rep((Nh, Nh)), rep((1, Nh)),                     # hidden 2
            rep((No, Nh)), rep((1, No)),                     # fc_last
        ],
        out_specs=pl.BlockSpec((tb, No), lambda i: (i, 0)),
        compiler_params=pltpu.CompilerParams(
            dimension_semantics=(("arbitrary",) if num_tiles == 1
                                 else ("parallel",))),
        cost_estimate=cost,
    )(
        x_p,
        params["w_first"], bias2d(params["b_first"]),
        params["w_h0"], bias2d(params["b_h0"]),
        params["w_h1"], bias2d(params["b_h1"]),
        params["w_h2"], bias2d(params["b_h2"]),
        params["w_last"], bias2d(params["b_last"]),
    )
    return y if B_pad == B else y[:B]


def init_params(key, Ni, No, Nh=16):
    """Deterministic synthetic parameters in PyTorch Linear layout:
    weights (out, in), biases (out,)."""
    ks = jax.random.split(key, 10)

    def linear(kw, kb, fan_in, fan_out):
        bound = 1.0 / jnp.sqrt(fan_in)
        w = jax.random.uniform(kw, (fan_out, fan_in), jnp.float32, -bound, bound)
        b = jax.random.uniform(kb, (fan_out,), jnp.float32, -bound, bound)
        return w, b

    p = {}
    p["w_first"], p["b_first"] = linear(ks[0], ks[1], Ni, Nh)
    p["w_h0"], p["b_h0"] = linear(ks[2], ks[3], Nh, Nh)
    p["w_h1"], p["b_h1"] = linear(ks[4], ks[5], Nh, Nh)
    p["w_h2"], p["b_h2"] = linear(ks[6], ks[7], Nh, Nh)
    p["w_last"], p["b_last"] = linear(ks[8], ks[9], Nh, No)
    return p


def reference_forward(x, p):
    """Pure-JAX reference mirroring the PyTorch module."""
    h = x @ p["w_first"].T + p["b_first"]
    h0 = h
    for name in ("h0", "h1", "h2"):
        h = jnp.maximum(h, 0.0)
        h = h @ p[f"w_{name}"].T + p[f"b_{name}"]
    h = jnp.maximum(h0 + h, 0.0)
    return h @ p["w_last"].T + p["b_last"]


if __name__ == "__main__":
    Ni, No, Nh = 4, 3, 16
    B = 500          # non-multiple of 8/128: exercises the no-pad single-step path

    key = jax.random.PRNGKey(0)
    k_x, k_p = jax.random.split(key)
    x = jax.random.normal(k_x, (B, Ni), jnp.float32)
    params = init_params(k_p, Ni, No, Nh)

    y = conditional_transform(x, params)
    y = jax.block_until_ready(y)

    y_ref = reference_forward(x, params)
    assert y.shape == (B, No)
    assert jnp.allclose(y, y_ref, atol=1e-5, rtol=1e-5), "mismatch vs reference"

    print("KERNEL_OK")
</pallas_src>

<mosaic_0001>
module attributes {stable_mosaic.version = 11 : i64} {
  func.func @_mlp_kernel(%arg0: i32, %arg1: memref<500x4xf32, #tpu.memory_space<vmem>>, %arg2: memref<16x4xf32, #tpu.memory_space<vmem>>, %arg3: memref<1x16xf32, #tpu.memory_space<vmem>>, %arg4: memref<16x16xf32, #tpu.memory_space<vmem>>, %arg5: memref<1x16xf32, #tpu.memory_space<vmem>>, %arg6: memref<16x16xf32, #tpu.memory_space<vmem>>, %arg7: memref<1x16xf32, #tpu.memory_space<vmem>>, %arg8: memref<16x16xf32, #tpu.memory_space<vmem>>, %arg9: memref<1x16xf32, #tpu.memory_space<vmem>>, %arg10: memref<3x16xf32, #tpu.memory_space<vmem>>, %arg11: memref<1x3xf32, #tpu.memory_space<vmem>>, %arg12: memref<500x3xf32, #tpu.memory_space<vmem>>) attributes {dimension_semantics = [#tpu.dimension_semantics<arbitrary>], iteration_bounds = array<i64: 1>, scalar_prefetch = 0 : i64, scratch_operands = 0 : i64, tpu.core_type = #tpu.core_type<tc>, window_params = [{transform_indices = @transform_0, window_bounds = array<i64: 500, 4>}, {pipeline_mode = #tpu.pipeline_mode<synchronous>, transform_indices = @transform_1, window_bounds = array<i64: 16, 4>}, {pipeline_mode = #tpu.pipeline_mode<synchronous>, transform_indices = @transform_2, window_bounds = array<i64: 1, 16>}, {pipeline_mode = #tpu.pipeline_mode<synchronous>, transform_indices = @transform_3, window_bounds = array<i64: 16, 16>}, {pipeline_mode = #tpu.pipeline_mode<synchronous>, transform_indices = @transform_4, window_bounds = array<i64: 1, 16>}, {pipeline_mode = #tpu.pipeline_mode<synchronous>, transform_indices = @transform_5, window_bounds = array<i64: 16, 16>}, {pipeline_mode = #tpu.pipeline_mode<synchronous>, transform_indices = @transform_6, window_bounds = array<i64: 1, 16>}, {pipeline_mode = #tpu.pipeline_mode<synchronous>, transform_indices = @transform_7, window_bounds = array<i64: 16, 16>}, {pipeline_mode = #tpu.pipeline_mode<synchronous>, transform_indices = @transform_8, window_bounds = array<i64: 1, 16>}, {pipeline_mode = #tpu.pipeline_mode<synchronous>, transform_indices = @transform_9, window_bounds = array<i64: 3, 16>}, {pipeline_mode = #tpu.pipeline_mode<synchronous>, transform_indices = @transform_10, window_bounds = array<i64: 1, 3>}, {transform_indices = @transform_11, window_bounds = array<i64: 500, 3>}]} {
    %c0 = arith.constant 0 : index
    %c0_0 = arith.constant 0 : index
    %0 = vector.load %arg1[%c0, %c0_0] : memref<500x4xf32, #tpu.memory_space<vmem>>, vector<500x4xf32>
    %c0_1 = arith.constant 0 : index
    %c0_2 = arith.constant 0 : index
    %1 = vector.load %arg2[%c0_1, %c0_2] : memref<16x4xf32, #tpu.memory_space<vmem>>, vector<16x4xf32>
    %cst = arith.constant dense<0.000000e+00> : vector<500x16xf32>
    %2 = tpu.matmul %0, %1, %cst {dimension_numbers = #tpu.dot_dimension_numbers<[1], [1], [0], [0], [0, 0, 1, 0], [], []>} : vector<500x4xf32>, vector<16x4xf32>, vector<500x16xf32> -> vector<500x16xf32>
    %c0_3 = arith.constant 0 : index
    %c0_4 = arith.constant 0 : index
    %3 = vector.load %arg3[%c0_3, %c0_4] : memref<1x16xf32, #tpu.memory_space<vmem>>, vector<1x16xf32>
    %4 = vector.broadcast %3 : vector<1x16xf32> to vector<500x16xf32>
    %5 = arith.addf %2, %4 : vector<500x16xf32>
    %cst_5 = arith.constant 0.000000e+00 : f32
    %6 = vector.broadcast %cst_5 : f32 to vector<500x16xf32>
    %7 = arith.maximumf %5, %6 : vector<500x16xf32>
    %c0_6 = arith.constant 0 : index
    %c0_7 = arith.constant 0 : index
    %8 = vector.load %arg4[%c0_6, %c0_7] : memref<16x16xf32, #tpu.memory_space<vmem>>, vector<16x16xf32>
    %cst_8 = arith.constant dense<0.000000e+00> : vector<500x16xf32>
    %9 = tpu.matmul %7, %8, %cst_8 {dimension_numbers = #tpu.dot_dimension_numbers<[1], [1], [0], [0], [0, 0, 1, 0], [], []>} : vector<500x16xf32>, vector<16x16xf32>, vector<500x16xf32> -> vector<500x16xf32>
    %c0_9 = arith.constant 0 : index
    %c0_10 = arith.constant 0 : index
    %10 = vector.load %arg5[%c0_9, %c0_10] : memref<1x16xf32, #tpu.memory_space<vmem>>, vector<1x16xf32>
    %11 = vector.broadcast %10 : vector<1x16xf32> to vector<500x16xf32>
    %12 = arith.addf %9, %11 : vector<500x16xf32>
    %cst_11 = arith.constant 0.000000e+00 : f32
    %13 = vector.broadcast %cst_11 : f32 to vector<500x16xf32>
    %14 = arith.maximumf %12, %13 : vector<500x16xf32>
    %c0_12 = arith.constant 0 : index
    %c0_13 = arith.constant 0 : index
    %15 = vector.load %arg6[%c0_12, %c0_13] : memref<16x16xf32, #tpu.memory_space<vmem>>, vector<16x16xf32>
    %cst_14 = arith.constant dense<0.000000e+00> : vector<500x16xf32>
    %16 = tpu.matmul %14, %15, %cst_14 {dimension_numbers = #tpu.dot_dimension_numbers<[1], [1], [0], [0], [0, 0, 1, 0], [], []>} : vector<500x16xf32>, vector<16x16xf32>, vector<500x16xf32> -> vector<500x16xf32>
    %c0_15 = arith.constant 0 : index
    %c0_16 = arith.constant 0 : index
    %17 = vector.load %arg7[%c0_15, %c0_16] : memref<1x16xf32, #tpu.memory_space<vmem>>, vector<1x16xf32>
    %18 = vector.broadcast %17 : vector<1x16xf32> to vector<500x16xf32>
    %19 = arith.addf %16, %18 : vector<500x16xf32>
    %cst_17 = arith.constant 0.000000e+00 : f32
    %20 = vector.broadcast %cst_17 : f32 to vector<500x16xf32>
    %21 = arith.maximumf %19, %20 : vector<500x16xf32>
    %c0_18 = arith.constant 0 : index
    %c0_19 = arith.constant 0 : index
    %22 = vector.load %arg8[%c0_18, %c0_19] : memref<16x16xf32, #tpu.memory_space<vmem>>, vector<16x16xf32>
    %cst_20 = arith.constant dense<0.000000e+00> : vector<500x16xf32>
    %23 = tpu.matmul %21, %22, %cst_20 {dimension_numbers = #tpu.dot_dimension_numbers<[1], [1], [0], [0], [0, 0, 1, 0], [], []>} : vector<500x16xf32>, vector<16x16xf32>, vector<500x16xf32> -> vector<500x16xf32>
    %c0_21 = arith.constant 0 : index
    %c0_22 = arith.constant 0 : index
    %24 = vector.load %arg9[%c0_21, %c0_22] : memref<1x16xf32, #tpu.memory_space<vmem>>, vector<1x16xf32>
    %25 = vector.broadcast %24 : vector<1x16xf32> to vector<500x16xf32>
    %26 = arith.addf %23, %25 : vector<500x16xf32>
    %27 = arith.addf %5, %26 : vector<500x16xf32>
    %cst_23 = arith.constant 0.000000e+00 : f32
    %28 = vector.broadcast %cst_23 : f32 to vector<500x16xf32>
    %29 = arith.maximumf %27, %28 : vector<500x16xf32>
    %c0_24 = arith.constant 0 : index
    %c0_25 = arith.constant 0 : index
    %30 = vector.load %arg10[%c0_24, %c0_25] : memref<3x16xf32, #tpu.memory_space<vmem>>, vector<3x16xf32>
    %cst_26 = arith.constant dense<0.000000e+00> : vector<500x3xf32>
    %31 = tpu.matmul %29, %30, %cst_26 {dimension_numbers = #tpu.dot_dimension_numbers<[1], [1], [0], [0], [0, 0, 1, 0], [], []>} : vector<500x16xf32>, vector<3x16xf32>, vector<500x3xf32> -> vector<500x3xf32>
    %c0_27 = arith.constant 0 : index
    %c0_28 = arith.constant 0 : index
    %32 = vector.load %arg11[%c0_27, %c0_28] : memref<1x3xf32, #tpu.memory_space<vmem>>, vector<1x3xf32>
    %33 = vector.broadcast %32 : vector<1x3xf32> to vector<500x3xf32>
    %34 = arith.addf %31, %33 : vector<500x3xf32>
    %c0_29 = arith.constant 0 : index
    %c0_30 = arith.constant 0 : index
    %35 = vector.load %arg12[%c0_29, %c0_30] : memref<500x3xf32, #tpu.memory_space<vmem>>, vector<500x3xf32>
    tpu.vector_store %arg12[%c0_29, %c0_30], %34 {strides = array<i32>} : memref<500x3xf32, #tpu.memory_space<vmem>>, vector<500x3xf32>,
    return
  }
  func.func @transform_0(%arg0: i32) -> (i32, i32) {
    %c0_i32 = arith.constant 0 : i32
    %c0_i32_0 = arith.constant 0 : i32
    return %arg0, %c0_i32 : i32, i32
  }
  func.func @transform_1(%arg0: i32) -> (i32, i32) {
    %c0_i32 = arith.constant 0 : i32
    %c0_i32_0 = arith.constant 0 : i32
    %c0_i32_1 = arith.constant 0 : i32
    return %c0_i32, %c0_i32_0 : i32, i32
  }
  func.func @transform_2(%arg0: i32) -> (i32, i32) {
    %c0_i32 = arith.constant 0 : i32
    %c0_i32_0 = arith.constant 0 : i32
    %c0_i32_1 = arith.constant 0 : i32
    return %c0_i32, %c0_i32_0 : i32, i32
  }
  func.func @transform_3(%arg0: i32) -> (i32, i32) {
    %c0_i32 = arith.constant 0 : i32
    %c0_i32_0 = arith.constant 0 : i32
    %c0_i32_1 = arith.constant 0 : i32
    return %c0_i32, %c0_i32_0 : i32, i32
  }
  func.func @transform_4(%arg0: i32) -> (i32, i32) {
    %c0_i32 = arith.constant 0 : i32
    %c0_i32_0 = arith.constant 0 : i32
    %c0_i32_1 = arith.constant 0 : i32
    return %c0_i32, %c0_i32_0 : i32, i32
  }
  func.func @transform_5(%arg0: i32) -> (i32, i32) {
    %c0_i32 = arith.constant 0 : i32
    %c0_i32_0 = arith.constant 0 : i32
    %c0_i32_1 = arith.constant 0 : i32
    return %c0_i32, %c0_i32_0 : i32, i32
  }
  func.func @transform_6(%arg0: i32) -> (i32, i32) {
    %c0_i32 = arith.constant 0 : i32
    %c0_i32_0 = arith.constant 0 : i32
    %c0_i32_1 = arith.constant 0 : i32
    return %c0_i32, %c0_i32_0 : i32, i32
  }
  func.func @transform_7(%arg0: i32) -> (i32, i32) {
    %c0_i32 = arith.constant 0 : i32
    %c0_i32_0 = arith.constant 0 : i32
    %c0_i32_1 = arith.constant 0 : i32
    return %c0_i32, %c0_i32_0 : i32, i32
  }
  func.func @transform_8(%arg0: i32) -> (i32, i32) {
    %c0_i32 = arith.constant 0 : i32
    %c0_i32_0 = arith.constant 0 : i32
    %c0_i32_1 = arith.constant 0 : i32
    return %c0_i32, %c0_i32_0 : i32, i32
  }
  func.func @transform_9(%arg0: i32) -> (i32, i32) {
    %c0_i32 = arith.constant 0 : i32
    %c0_i32_0 = arith.constant 0 : i32
    %c0_i32_1 = arith.constant 0 : i32
    return %c0_i32, %c0_i32_0 : i32, i32
  }
  func.func @transform_10(%arg0: i32) -> (i32, i32) {
    %c0_i32 = arith.constant 0 : i32
    %c0_i32_0 = arith.constant 0 : i32
    %c0_i32_1 = arith.constant 0 : i32
    return %c0_i32, %c0_i32_0 : i32, i32
  }
  func.func @transform_11(%arg0: i32) -> (i32, i32) {
    %c0_i32 = arith.constant 0 : i32
    %c0_i32_0 = arith.constant 0 : i32
    return %arg0, %c0_i32 : i32, i32
  }
}

</mosaic_0001>

<llo_original>
// kernel: conditional_transform.1
$region0: #{conditional_transform.1}
  #allocation0 [shape = 'u32[]', space=smem, size = 0x4, offset = 0x4, fixed_abs, tag = 'smem constant byte address 0x4 - core index']
  #allocation1 [shape = 'u32[72,128]{1,0:T(1,128)}', space=vmem, size = 0x9000, scoped, tag = 'internal scratch']
  %s0 = inlined_call_operand.vmem [shape: f32[500,4], index: 0, kind: input, shape index: {}]
  %s1 = inlined_call_operand.vmem [shape: f32[16,4], index: 1, kind: input, shape index: {}]
  %s2 = inlined_call_operand.vmem [shape: f32[1,16], index: 2, kind: input, shape index: {}]
  %s3 = inlined_call_operand.vmem [shape: f32[16,16], index: 3, kind: input, shape index: {}]
  %s4 = inlined_call_operand.vmem [shape: f32[1,16], index: 4, kind: input, shape index: {}]
  %s5 = inlined_call_operand.vmem [shape: f32[16,16], index: 5, kind: input, shape index: {}]
  %s6 = inlined_call_operand.vmem [shape: f32[1,16], index: 6, kind: input, shape index: {}]
  %s7 = inlined_call_operand.vmem [shape: f32[16,16], index: 7, kind: input, shape index: {}]
  %s8 = inlined_call_operand.vmem [shape: f32[1,16], index: 8, kind: input, shape index: {}]
  %s9 = inlined_call_operand.vmem [shape: f32[3,16], index: 9, kind: input, shape index: {}]
  %s10 = inlined_call_operand.vmem [shape: f32[1,3], index: 10, kind: input, shape index: {}]
  %s11 = inlined_call_operand.vmem [shape: f32[500,3], index: 11, kind: output, shape index: {}]
  %s12 = sld [smem:[#allocation0]]
  $region54: #{conditional_transform.1} parent=0
    _
  %s14 = ssub.s32 1, %s12
  %s15 = scalar_select 0, %s14, %s12
  // Predicated region
  $region2: #{conditional_transform.1} parent=0 // pred_check
    _
  $region3: #{conditional_transform.1} parent=0 // pred_check_branch
    %17 = sbr.rel (0) target = $region5
  $region4: #{conditional_transform.1} parent=0 // pred_region
    _
  $region5: #{conditional_transform.1} parent=0 // pred_fallthru
    _
  // Predicated region
  $region6: #{conditional_transform.1} parent=0 // pred_check
    _
  $region7: #{conditional_transform.1} parent=0 // pred_check_branch
    %19 = sbr.rel (0) target = $region9
  $region8: #{conditional_transform.1} parent=0 // pred_region
    _
  $region9: #{conditional_transform.1} parent=0 // pred_fallthru
    _
  // Predicated region
  $region10: #{conditional_transform.1} parent=0 // pred_check
    _
  $region11: #{conditional_transform.1} parent=0 // pred_check_branch
    %21 = sbr.rel (0) target = $region13
  $region12: #{conditional_transform.1} parent=0 // pred_region
    _
  $region13: #{conditional_transform.1} parent=0 // pred_fallthru
    _
  // Predicated region
  $region14: #{conditional_transform.1} parent=0 // pred_check
    _
  $region15: #{conditional_transform.1} parent=0 // pred_check_branch
    %23 = sbr.rel (0) target = $region17
  $region16: #{conditional_transform.1} parent=0 // pred_region
    _
  $region17: #{conditional_transform.1} parent=0 // pred_fallthru
    _
  // Predicated region
  $region18: #{conditional_transform.1} parent=0 // pred_check
    _
  $region19: #{conditional_transform.1} parent=0 // pred_check_branch
    %25 = sbr.rel (0) target = $region21
  $region20: #{conditional_transform.1} parent=0 // pred_region
    _
  $region21: #{conditional_transform.1} parent=0 // pred_fallthru
    _
  // Predicated region
  $region22: #{conditional_transform.1} parent=0 // pred_check
    _
  $region23: #{conditional_transform.1} parent=0 // pred_check_branch
    %27 = sbr.rel (0) target = $region25
  $region24: #{conditional_transform.1} parent=0 // pred_region
    _
  $region25: #{conditional_transform.1} parent=0 // pred_fallthru
    _
  // Predicated region
  $region26: #{conditional_transform.1} parent=0 // pred_check
    _
  $region27: #{conditional_transform.1} parent=0 // pred_check_branch
    %29 = sbr.rel (0) target = $region29
  $region28: #{conditional_transform.1} parent=0 // pred_region
    _
  $region29: #{conditional_transform.1} parent=0 // pred_fallthru
    _
  // Predicated region
  $region30: #{conditional_transform.1} parent=0 // pred_check
    _
  $region31: #{conditional_transform.1} parent=0 // pred_check_branch
    %31 = sbr.rel (0) target = $region33
  $region32: #{conditional_transform.1} parent=0 // pred_region
    _
  $region33: #{conditional_transform.1} parent=0 // pred_fallthru
    _
  // Predicated region
  $region34: #{conditional_transform.1} parent=0 // pred_check
    _
  $region35: #{conditional_transform.1} parent=0 // pred_check_branch
    %33 = sbr.rel (0) target = $region37
  $region36: #{conditional_transform.1} parent=0 // pred_region
    _
  $region37: #{conditional_transform.1} parent=0 // pred_fallthru
    _
  // Predicated region
  $region38: #{conditional_transform.1} parent=0 // pred_check
    _
  $region39: #{conditional_transform.1} parent=0 // pred_check_branch
    %35 = sbr.rel (0) target = $region41
  $region40: #{conditional_transform.1} parent=0 // pred_region
    _
  $region41: #{conditional_transform.1} parent=0 // pred_fallthru
    _
  // Predicated region
  $region42: #{conditional_transform.1} parent=0 // pred_check
    _
  $region43: #{conditional_transform.1} parent=0 // pred_check_branch
    %37 = sbr.rel (0) target = $region45
  $region44: #{conditional_transform.1} parent=0 // pred_region
    _
  $region45: #{conditional_transform.1} parent=0 // pred_fallthru
    _
  %v38 = vld [vmem:[%s0] sm:$0xff]
  %v39 = vld [vmem:[%s0 + $0x8] sm:$0xff]
  %v40 = vld [vmem:[%s0 + $0x10] sm:$0xff]
  %v41 = vld [vmem:[%s0 + $0x18] sm:$0xff]
  %v42 = vld [vmem:[%s0 + $0x20] sm:$0xff]
  %v43 = vld [vmem:[%s0 + $0x28] sm:$0xff]
  %v44 = vld [vmem:[%s0 + $0x30] sm:$0xff]
  %v45 = vld [vmem:[%s0 + $0x38] sm:$0xff]
  %v46 = vld [vmem:[%s0 + $0x40] sm:$0xff]
  %v47 = vld [vmem:[%s0 + $0x48] sm:$0xff]
  %v48 = vld [vmem:[%s0 + $0x50] sm:$0xff]
  %v49 = vld [vmem:[%s0 + $0x58] sm:$0xff]
  %v50 = vld [vmem:[%s0 + $0x60] sm:$0xff]
  %v51 = vld [vmem:[%s0 + $0x68] sm:$0xff]
  %v52 = vld [vmem:[%s0 + $0x70] sm:$0xff]
  %v53 = vld [vmem:[%s0 + $0x78] sm:$0xff]
  %v54 = vld [vmem:[%s0 + $0x80] sm:$0xff]
  %v55 = vld [vmem:[%s0 + $0x88] sm:$0xff]
  %v56 = vld [vmem:[%s0 + $0x90] sm:$0xff]
  %v57 = vld [vmem:[%s0 + $0x98] sm:$0xff]
  %v58 = vld [vmem:[%s0 + $0xa0] sm:$0xff]
  %v59 = vld [vmem:[%s0 + $0xa8] sm:$0xff]
  %v60 = vld [vmem:[%s0 + $0xb0] sm:$0xff]
  %v61 = vld [vmem:[%s0 + $0xb8] sm:$0xff]
  %v62 = vld [vmem:[%s0 + $0xc0] sm:$0xff]
  %v63 = vld [vmem:[%s0 + $0xc8] sm:$0xff]
  %v64 = vld [vmem:[%s0 + $0xd0] sm:$0xff]
  %v65 = vld [vmem:[%s0 + $0xd8] sm:$0xff]
  %v66 = vld [vmem:[%s0 + $0xe0] sm:$0xff]
  %v67 = vld [vmem:[%s0 + $0xe8] sm:$0xff]
  %v68 = vld [vmem:[%s0 + $0xf0] sm:$0xff]
  %v69 = vld [vmem:[%s0 + $0xf8] sm:$0xff]
  %v70 = vld [vmem:[%s0 + $0x100] sm:$0xff]
  %v71 = vld [vmem:[%s0 + $0x108] sm:$0xff]
  %v72 = vld [vmem:[%s0 + $0x110] sm:$0xff]
  %v73 = vld [vmem:[%s0 + $0x118] sm:$0xff]
  %v74 = vld [vmem:[%s0 + $0x120] sm:$0xff]
  %v75 = vld [vmem:[%s0 + $0x128] sm:$0xff]
  %v76 = vld [vmem:[%s0 + $0x130] sm:$0xff]
  %v77 = vld [vmem:[%s0 + $0x138] sm:$0xff]
  %v78 = vld [vmem:[%s0 + $0x140] sm:$0xff]
  %v79 = vld [vmem:[%s0 + $0x148] sm:$0xff]
  %v80 = vld [vmem:[%s0 + $0x150] sm:$0xff]
  %v81 = vld [vmem:[%s0 + $0x158] sm:$0xff]
  %v82 = vld [vmem:[%s0 + $0x160] sm:$0xff]
  %v83 = vld [vmem:[%s0 + $0x168] sm:$0xff]
  %v84 = vld [vmem:[%s0 + $0x170] sm:$0xff]
  %v85 = vld [vmem:[%s0 + $0x178] sm:$0xff]
  %v86 = vld [vmem:[%s0 + $0x180] sm:$0xff]
  %v87 = vld [vmem:[%s0 + $0x188] sm:$0xff]
  %v88 = vld [vmem:[%s0 + $0x190] sm:$0xff]
  %v89 = vld [vmem:[%s0 + $0x198] sm:$0xff]
  %v90 = vld [vmem:[%s0 + $0x1a0] sm:$0xff]
  %v91 = vld [vmem:[%s0 + $0x1a8] sm:$0xff]
  %v92 = vld [vmem:[%s0 + $0x1b0] sm:$0xff]
  %v93 = vld [vmem:[%s0 + $0x1b8] sm:$0xff]
  %v94 = vld [vmem:[%s0 + $0x1c0] sm:$0xff]
  %v95 = vld [vmem:[%s0 + $0x1c8] sm:$0xff]
  %v96 = vld [vmem:[%s0 + $0x1d0] sm:$0xff]
  %v97 = vld [vmem:[%s0 + $0x1d8] sm:$0xff]
  %v98 = vld [vmem:[%s0 + $0x1e0] sm:$0xff]
  %v99 = vld [vmem:[%s0 + $0x1e8] sm:$0xff]
  %v100 = vld [vmem:[%s0 + $0x1f0] sm:$0xf]
  %v101 = vld [vmem:[%s1] sm:$0xff]
  %v102 = vld [vmem:[%s1 + $0x8] sm:$0xff]
  %v103 = vld [vmem:[%s2] sm:$0x1]
  %v105 = vperm.slane %v103, 0
  %vm107 = vcmask 31744
  %v109 = vsel %vm107, %v38, 0
  %v112 = vsel %vm107, %v39, 0
  %v115 = vsel %vm107, %v40, 0
  %v118 = vsel %vm107, %v41, 0
  %v121 = vsel %vm107, %v42, 0
  %v124 = vsel %vm107, %v43, 0
  %v127 = vsel %vm107, %v44, 0
  %v130 = vsel %vm107, %v45, 0
  %v133 = vsel %vm107, %v46, 0
  %v136 = vsel %vm107, %v47, 0
  %v139 = vsel %vm107, %v48, 0
  %v142 = vsel %vm107, %v49, 0
  %v145 = vsel %vm107, %v50, 0
  %v148 = vsel %vm107, %v51, 0
  %v151 = vsel %vm107, %v52, 0
  %v154 = vsel %vm107, %v53, 0
  %v157 = vsel %vm107, %v54, 0
  %v160 = vsel %vm107, %v55, 0
  %v163 = vsel %vm107, %v56, 0
  %v166 = vsel %vm107, %v57, 0
  %v169 = vsel %vm107, %v58, 0
  %v172 = vsel %vm107, %v59, 0
  %v175 = vsel %vm107, %v60, 0
  %v178 = vsel %vm107, %v61, 0
  %v181 = vsel %vm107, %v62, 0
  %v184 = vsel %vm107, %v63, 0
  %v187 = vsel %vm107, %v64, 0
  %v190 = vsel %vm107, %v65, 0
  %v193 = vsel %vm107, %v66, 0
  %v196 = vsel %vm107, %v67, 0
  %v199 = vsel %vm107, %v68, 0
  %v202 = vsel %vm107, %v69, 0
  %v205 = vsel %vm107, %v70, 0
  %v208 = vsel %vm107, %v71, 0
  %v211 = vsel %vm107, %v72, 0
  %v214 = vsel %vm107, %v73, 0
  %v217 = vsel %vm107, %v74, 0
  %v220 = vsel %vm107, %v75, 0
  %v223 = vsel %vm107, %v76, 0
  %v226 = vsel %vm107, %v77, 0
  %v229 = vsel %vm107, %v78, 0
  %v232 = vsel %vm107, %v79, 0
  %v235 = vsel %vm107, %v80, 0
  %v238 = vsel %vm107, %v81, 0
  %v241 = vsel %vm107, %v82, 0
  %v244 = vsel %vm107, %v83, 0
  %v247 = vsel %vm107, %v84, 0
  %v250 = vsel %vm107, %v85, 0
  %v253 = vsel %vm107, %v86, 0
  %v256 = vsel %vm107, %v87, 0
  %v259 = vsel %vm107, %v88, 0
  %v262 = vsel %vm107, %v89, 0
  %v265 = vsel %vm107, %v90, 0
  %v268 = vsel %vm107, %v91, 0
  %v271 = vsel %vm107, %v92, 0
  %v274 = vsel %vm107, %v93, 0
  %v277 = vsel %vm107, %v94, 0
  %v280 = vsel %vm107, %v95, 0
  %v283 = vsel %vm107, %v96, 0
  %v286 = vsel %vm107, %v97, 0
  %v289 = vsel %vm107, %v98, 0
  %v292 = vsel %vm107, %v99, 0
  %v295 = vsel %vm107, %v100, 0
  %v298 = vsel %vm107, %v101, 0
  %v301 = vsel %vm107, %v102, 0
  %303 = vmatpush.xpose.msra.mxu0 0.0
  %304 = vmatpush.xpose.msra.mxu0 0.0
  %305 = vmatpush.xpose.msra.mxu0 0.0
  %306 = vmatpush.xpose.msra.mxu0 0.0
  %307 = vmatpush.xpose.msra.mxu0 0.0
  %308 = vmatpush.xpose.msra.mxu0 0.0
  %309 = vmatpush.xpose.msra.mxu0 0.0
  %310 = vmatpush.xpose.msra.mxu0 0.0
  %311 = vmatpush.xpose.msra.mxu0 0.0
  %312 = vmatpush.xpose.msra.mxu0 0.0
  %313 = vmatpush.xpose.msra.mxu0 0.0
  %314 = vmatpush.xpose.msra.mxu0 0.0
  %315 = vmatpush.xpose.msra.mxu0 0.0
  %316 = vmatpush.xpose.msra.mxu0 0.0
  %317 = vmatpush.xpose.msra.mxu0 %v301
  %318 = vmatpush.xpose.msra.mxu0 %v298
  %319 = vmatmul.f32.gmra.mxu0 %v109
  %v320 = vpop.f32.mrf.mxu0
  %v321 = vadd.f32 %v105, %v320
  %322 = vmatmul.f32.gmra.mxu0 %v112
  %v323 = vpop.f32.mrf.mxu0
  %v324 = vadd.f32 %v105, %v323
  %325 = vmatmul.f32.gmra.mxu0 %v115
  %v326 = vpop.f32.mrf.mxu0
  %v327 = vadd.f32 %v105, %v326
  %328 = vmatmul.f32.gmra.mxu0 %v118
  %v329 = vpop.f32.mrf.mxu0
  %v330 = vadd.f32 %v105, %v329
  %331 = vmatmul.f32.gmra.mxu0 %v121
  %v332 = vpop.f32.mrf.mxu0
  %v333 = vadd.f32 %v105, %v332
  %334 = vmatmul.f32.gmra.mxu0 %v124
  %v335 = vpop.f32.mrf.mxu0
  %v336 = vadd.f32 %v105, %v335
  %337 = vmatmul.f32.gmra.mxu0 %v127
  %v338 = vpop.f32.mrf.mxu0
  %v339 = vadd.f32 %v105, %v338
  %340 = vmatmul.f32.gmra.mxu0 %v130
  %v341 = vpop.f32.mrf.mxu0
  %v342 = vadd.f32 %v105, %v341
  %343 = vmatmul.f32.gmra.mxu0 %v133
  %v344 = vpop.f32.mrf.mxu0
  %v345 = vadd.f32 %v105, %v344
  %346 = vmatmul.f32.gmra.mxu0 %v136
  %v347 = vpop.f32.mrf.mxu0
  %v348 = vadd.f32 %v105, %v347
  %349 = vmatmul.f32.gmra.mxu0 %v139
  %v350 = vpop.f32.mrf.mxu0
  %v351 = vadd.f32 %v105, %v350
  %352 = vmatmul.f32.gmra.mxu0 %v142
  %v353 = vpop.f32.mrf.mxu0
  %v354 = vadd.f32 %v105, %v353
  %355 = vmatmul.f32.gmra.mxu0 %v145
  %v356 = vpop.f32.mrf.mxu0
  %v357 = vadd.f32 %v105, %v356
  %358 = vmatmul.f32.gmra.mxu0 %v148
  %v359 = vpop.f32.mrf.mxu0
  %v360 = vadd.f32 %v105, %v359
  %361 = vmatmul.f32.gmra.mxu0 %v151
  %v362 = vpop.f32.mrf.mxu0
  %v363 = vadd.f32 %v105, %v362
  %364 = vmatmul.f32.gmra.mxu0 %v154
  %v365 = vpop.f32.mrf.mxu0
  %v366 = vadd.f32 %v105, %v365
  %367 = vmatmul.f32.gmra.mxu0 %v157
  %v368 = vpop.f32.mrf.mxu0
  %v369 = vadd.f32 %v105, %v368
  %370 = vmatmul.f32.gmra.mxu0 %v160
  %v371 = vpop.f32.mrf.mxu0
  %v372 = vadd.f32 %v105, %v371
  %373 = vmatmul.f32.gmra.mxu0 %v163
  %v374 = vpop.f32.mrf.mxu0
  %v375 = vadd.f32 %v105, %v374
  %376 = vmatmul.f32.gmra.mxu0 %v166
  %v377 = vpop.f32.mrf.mxu0
  %v378 = vadd.f32 %v105, %v377
  %379 = vmatmul.f32.gmra.mxu0 %v169
  %v380 = vpop.f32.mrf.mxu0
  %v381 = vadd.f32 %v105, %v380
  %382 = vmatmul.f32.gmra.mxu0 %v172
  %v383 = vpop.f32.mrf.mxu0
  %v384 = vadd.f32 %v105, %v383
  %385 = vmatmul.f32.gmra.mxu0 %v175
  %v386 = vpop.f32.mrf.mxu0
  %v387 = vadd.f32 %v105, %v386
  %388 = vmatmul.f32.gmra.mxu0 %v178
  %v389 = vpop.f32.mrf.mxu0
  %v390 = vadd.f32 %v105, %v389
  %391 = vmatmul.f32.gmra.mxu0 %v181
  %v392 = vpop.f32.mrf.mxu0
  %v393 = vadd.f32 %v105, %v392
  %394 = vmatmul.f32.gmra.mxu0 %v184
  %v395 = vpop.f32.mrf.mxu0
  %v396 = vadd.f32 %v105, %v395
  %397 = vmatmul.f32.gmra.mxu0 %v187
  %v398 = vpop.f32.mrf.mxu0
  %v399 = vadd.f32 %v105, %v398
  %400 = vmatmul.f32.gmra.mxu0 %v190
  %v401 = vpop.f32.mrf.mxu0
  %v402 = vadd.f32 %v105, %v401
  %403 = vmatmul.f32.gmra.mxu0 %v193
  %v404 = vpop.f32.mrf.mxu0
  %v405 = vadd.f32 %v105, %v404
  %406 = vmatmul.f32.gmra.mxu0 %v196
  %v407 = vpop.f32.mrf.mxu0
  %v408 = vadd.f32 %v105, %v407
  %409 = vmatmul.f32.gmra.mxu0 %v199
  %v410 = vpop.f32.mrf.mxu0
  %v411 = vadd.f32 %v105, %v410
  %412 = vmatmul.f32.gmra.mxu0 %v202
  %v413 = vpop.f32.mrf.mxu0
  %v414 = vadd.f32 %v105, %v413
  %415 = vmatmul.f32.gmra.mxu0 %v205
  %v416 = vpop.f32.mrf.mxu0
  %v417 = vadd.f32 %v105, %v416
  %418 = vmatmul.f32.gmra.mxu0 %v208
  %v419 = vpop.f32.mrf.mxu0
  %v420 = vadd.f32 %v105, %v419
  %421 = vmatmul.f32.gmra.mxu0 %v211
  %v422 = vpop.f32.mrf.mxu0
  %v423 = vadd.f32 %v105, %v422
  %424 = vmatmul.f32.gmra.mxu0 %v214
  %v425 = vpop.f32.mrf.mxu0
  %v426 = vadd.f32 %v105, %v425
  %427 = vmatmul.f32.gmra.mxu0 %v217
  %v428 = vpop.f32.mrf.mxu0
  %v429 = vadd.f32 %v105, %v428
  %430 = vmatmul.f32.gmra.mxu0 %v220
  %v431 = vpop.f32.mrf.mxu0
  %v432 = vadd.f32 %v105, %v431
  %433 = vmatmul.f32.gmra.mxu0 %v223
  %v434 = vpop.f32.mrf.mxu0
  %v435 = vadd.f32 %v105, %v434
  %436 = vmatmul.f32.gmra.mxu0 %v226
  %v437 = vpop.f32.mrf.mxu0
  %v438 = vadd.f32 %v105, %v437
  %439 = vmatmul.f32.gmra.mxu0 %v229
  %v440 = vpop.f32.mrf.mxu0
  %v441 = vadd.f32 %v105, %v440
  %442 = vmatmul.f32.gmra.mxu0 %v232
  %v443 = vpop.f32.mrf.mxu0
  %v444 = vadd.f32 %v105, %v443
  %445 = vmatmul.f32.gmra.mxu0 %v235
  %v446 = vpop.f32.mrf.mxu0
  %v447 = vadd.f32 %v105, %v446
  %448 = vmatmul.f32.gmra.mxu0 %v238
  %v449 = vpop.f32.mrf.mxu0
  %v450 = vadd.f32 %v105, %v449
  %451 = vmatmul.f32.gmra.mxu0 %v241
  %v452 = vpop.f32.mrf.mxu0
  %v453 = vadd.f32 %v105, %v452
  %454 = vmatmul.f32.gmra.mxu0 %v244
  %v455 = vpop.f32.mrf.mxu0
  %v456 = vadd.f32 %v105, %v455
  %457 = vmatmul.f32.gmra.mxu0 %v247
  %v458 = vpop.f32.mrf.mxu0
  %v459 = vadd.f32 %v105, %v458
  %460 = vmatmul.f32.gmra.mxu0 %v250
  %v461 = vpop.f32.mrf.mxu0
  %v462 = vadd.f32 %v105, %v461
  %463 = vmatmul.f32.gmra.mxu0 %v253
  %v464 = vpop.f32.mrf.mxu0
  %v465 = vadd.f32 %v105, %v464
  %466 = vmatmul.f32.gmra.mxu0 %v256
  %v467 = vpop.f32.mrf.mxu0
  %v468 = vadd.f32 %v105, %v467
  %469 = vmatmul.f32.gmra.mxu0 %v259
  %v470 = vpop.f32.mrf.mxu0
  %v471 = vadd.f32 %v105, %v470
  %472 = vmatmul.f32.gmra.mxu0 %v262
  %v473 = vpop.f32.mrf.mxu0
  %v474 = vadd.f32 %v105, %v473
  %475 = vmatmul.f32.gmra.mxu0 %v265
  %v476 = vpop.f32.mrf.mxu0
  %v477 = vadd.f32 %v105, %v476
  %478 = vmatmul.f32.gmra.mxu0 %v268
  %v479 = vpop.f32.mrf.mxu0
  %v480 = vadd.f32 %v105, %v479
  %481 = vmatmul.f32.gmra.mxu0 %v271
  %v482 = vpop.f32.mrf.mxu0
  %v483 = vadd.f32 %v105, %v482
  %484 = vmatmul.f32.gmra.mxu0 %v274
  %v485 = vpop.f32.mrf.mxu0
  %v486 = vadd.f32 %v105, %v485
  %487 = vmatmul.f32.gmra.mxu0 %v277
  %v488 = vpop.f32.mrf.mxu0
  %v489 = vadd.f32 %v105, %v488
  %490 = vmatmul.f32.gmra.mxu0 %v280
  %v491 = vpop.f32.mrf.mxu0
  %v492 = vadd.f32 %v105, %v491
  %493 = vmatmul.f32.gmra.mxu0 %v283
  %v494 = vpop.f32.mrf.mxu0
  %v495 = vadd.f32 %v105, %v494
  %496 = vmatmul.f32.gmra.mxu0 %v286
  %v497 = vpop.f32.mrf.mxu0
  %v498 = vadd.f32 %v105, %v497
  %499 = vmatmul.f32.gmra.mxu0 %v289
  %v500 = vpop.f32.mrf.mxu0
  %v501 = vadd.f32 %v105, %v500
  %502 = vmatmul.f32.gmra.mxu0 %v292
  %v503 = vpop.f32.mrf.mxu0
  %v504 = vadd.f32 %v105, %v503
  %505 = vmatmul.f32.gmra.mxu0 %v295
  %v506 = vpop.f32.mrf.mxu0
  %v507 = vadd.f32 %v105, %v506
  %508 = vdwg.mxu0
  %v509 = vmax.f32 %v321, 0.0
  %v510 = vmax.f32 %v324, 0.0
  %v511 = vmax.f32 %v327, 0.0
  %v512 = vmax.f32 %v330, 0.0
  %v513 = vmax.f32 %v333, 0.0
  %v514 = vmax.f32 %v336, 0.0
  %v515 = vmax.f32 %v339, 0.0
  %v516 = vmax.f32 %v342, 0.0
  %v517 = vmax.f32 %v345, 0.0
  %v518 = vmax.f32 %v348, 0.0
  %v519 = vmax.f32 %v351, 0.0
  %v520 = vmax.f32 %v354, 0.0
  %v521 = vmax.f32 %v357, 0.0
  %v522 = vmax.f32 %v360, 0.0
  %v523 = vmax.f32 %v363, 0.0
  %v524 = vmax.f32 %v366, 0.0
  %v525 = vmax.f32 %v369, 0.0
  %v526 = vmax.f32 %v372, 0.0
  %v527 = vmax.f32 %v375, 0.0
  %v528 = vmax.f32 %v378, 0.0
  %v529 = vmax.f32 %v381, 0.0
  %v530 = vmax.f32 %v384, 0.0
  %v531 = vmax.f32 %v387, 0.0
  %v532 = vmax.f32 %v390, 0.0
  %v533 = vmax.f32 %v393, 0.0
  %v534 = vmax.f32 %v396, 0.0
  %v535 = vmax.f32 %v399, 0.0
  %v536 = vmax.f32 %v402, 0.0
  %v537 = vmax.f32 %v405, 0.0
  %v538 = vmax.f32 %v408, 0.0
  %v539 = vmax.f32 %v411, 0.0
  %v540 = vmax.f32 %v414, 0.0
  %v541 = vmax.f32 %v417, 0.0
  %v542 = vmax.f32 %v420, 0.0
  %v543 = vmax.f32 %v423, 0.0
  %v544 = vmax.f32 %v426, 0.0
  %v545 = vmax.f32 %v429, 0.0
  %v546 = vmax.f32 %v432, 0.0
  %v547 = vmax.f32 %v435, 0.0
  %v548 = vmax.f32 %v438, 0.0
  %v549 = vmax.f32 %v441, 0.0
  %v550 = vmax.f32 %v444, 0.0
  %v551 = vmax.f32 %v447, 0.0
  %v552 = vmax.f32 %v450, 0.0
  %v553 = vmax.f32 %v453, 0.0
  %v554 = vmax.f32 %v456, 0.0
  %v555 = vmax.f32 %v459, 0.0
  %v556 = vmax.f32 %v462, 0.0
  %v557 = vmax.f32 %v465, 0.0
  %v558 = vmax.f32 %v468, 0.0
  %v559 = vmax.f32 %v471, 0.0
  %v560 = vmax.f32 %v474, 0.0
  %v561 = vmax.f32 %v477, 0.0
  %v562 = vmax.f32 %v480, 0.0
  %v563 = vmax.f32 %v483, 0.0
  %v564 = vmax.f32 %v486, 0.0
  %v565 = vmax.f32 %v489, 0.0
  %v566 = vmax.f32 %v492, 0.0
  %v567 = vmax.f32 %v495, 0.0
  %v568 = vmax.f32 %v498, 0.0
  %v569 = vmax.f32 %v501, 0.0
  %v570 = vmax.f32 %v504, 0.0
  %v571 = vmax.f32 %v507, 0.0
  %v572 = vld [vmem:[%s3] sm:$0xff]
  %v573 = vld [vmem:[%s3 + $0x8] sm:$0xff]
  %v574 = vld [vmem:[%s4] sm:$0x1]
  %v576 = vperm.slane %v574, 0
  %vm578 = vcmask 130048
  %v580 = vsel %vm578, %v509, 0
  %v583 = vsel %vm578, %v510, 0
  %v586 = vsel %vm578, %v511, 0
  %v589 = vsel %vm578, %v512, 0
  %v592 = vsel %vm578, %v513, 0
  %v595 = vsel %vm578, %v514, 0
  %v598 = vsel %vm578, %v515, 0
  %v601 = vsel %vm578, %v516, 0
  %v604 = vsel %vm578, %v517, 0
  %v607 = vsel %vm578, %v518, 0
  %v610 = vsel %vm578, %v519, 0
  %v613 = vsel %vm578, %v520, 0
  %v616 = vsel %vm578, %v521, 0
  %v619 = vsel %vm578, %v522, 0
  %v622 = vsel %vm578, %v523, 0
  %v625 = vsel %vm578, %v524, 0
  %v628 = vsel %vm578, %v525, 0
  %v631 = vsel %vm578, %v526, 0
  %v634 = vsel %vm578, %v527, 0
  %v637 = vsel %vm578, %v528, 0
  %v640 = vsel %vm578, %v529, 0
  %v643 = vsel %vm578, %v530, 0
  %v646 = vsel %vm578, %v531, 0
  %v649 = vsel %vm578, %v532, 0
  %v652 = vsel %vm578, %v533, 0
  %v655 = vsel %vm578, %v534, 0
  %v658 = vsel %vm578, %v535, 0
  %v661 = vsel %vm578, %v536, 0
  %v664 = vsel %vm578, %v537, 0
  %v667 = vsel %vm578, %v538, 0
  %v670 = vsel %vm578, %v539, 0
  %v673 = vsel %vm578, %v540, 0
  %v676 = vsel %vm578, %v541, 0
  %v679 = vsel %vm578, %v542, 0
  %v682 = vsel %vm578, %v543, 0
  %v685 = vsel %vm578, %v544, 0
  %v688 = vsel %vm578, %v545, 0
  %v691 = vsel %vm578, %v546, 0
  %v694 = vsel %vm578, %v547, 0
  %v697 = vsel %vm578, %v548, 0
  %v700 = vsel %vm578, %v549, 0
  %v703 = vsel %vm578, %v550, 0
  %v706 = vsel %vm578, %v551, 0
  %v709 = vsel %vm578, %v552, 0
  %v712 = vsel %vm578, %v553, 0
  %v715 = vsel %vm578, %v554, 0
  %v718 = vsel %vm578, %v555, 0
  %v721 = vsel %vm578, %v556, 0
  %v724 = vsel %vm578, %v557, 0
  %v727 = vsel %vm578, %v558, 0
  %v730 = vsel %vm578, %v559, 0
  %v733 = vsel %vm578, %v560, 0
  %v736 = vsel %vm578, %v561, 0
  %v739 = vsel %vm578, %v562, 0
  %v742 = vsel %vm578, %v563, 0
  %v745 = vsel %vm578, %v564, 0
  %v748 = vsel %vm578, %v565, 0
  %v751 = vsel %vm578, %v566, 0
  %v754 = vsel %vm578, %v567, 0
  %v757 = vsel %vm578, %v568, 0
  %v760 = vsel %vm578, %v569, 0
  %v763 = vsel %vm578, %v570, 0
  %v766 = vsel %vm578, %v571, 0
  %v769 = vsel %vm578, %v572, 0
  %v772 = vsel %vm578, %v573, 0
  %774 = vmatpush.xpose.msra.mxu0 0.0
  %775 = vmatpush.xpose.msra.mxu0 0.0
  %776 = vmatpush.xpose.msra.mxu0 0.0
  %777 = vmatpush.xpose.msra.mxu0 0.0
  %778 = vmatpush.xpose.msra.mxu0 0.0
  %779 = vmatpush.xpose.msra.mxu0 0.0
  %780 = vmatpush.xpose.msra.mxu0 0.0
  %781 = vmatpush.xpose.msra.mxu0 0.0
  %782 = vmatpush.xpose.msra.mxu0 0.0
  %783 = vmatpush.xpose.msra.mxu0 0.0
  %784 = vmatpush.xpose.msra.mxu0 0.0
  %785 = vmatpush.xpose.msra.mxu0 0.0
  %786 = vmatpush.xpose.msra.mxu0 0.0
  %787 = vmatpush.xpose.msra.mxu0 0.0
  %788 = vmatpush.xpose.msra.mxu0 %v772
  %789 = vmatpush.xpose.msra.mxu0 %v769
  %790 = vmatmul.f32.gmra.mxu0 %v580
  %v791 = vpop.f32.mrf.mxu0
  %v792 = vadd.f32 %v576, %v791
  %793 = vmatmul.f32.gmra.mxu0 %v583
  %v794 = vpop.f32.mrf.mxu0
  %v795 = vadd.f32 %v576, %v794
  %796 = vmatmul.f32.gmra.mxu0 %v586
  %v797 = vpop.f32.mrf.mxu0
  %v798 = vadd.f32 %v576, %v797
  %799 = vmatmul.f32.gmra.mxu0 %v589
  %v800 = vpop.f32.mrf.mxu0
  %v801 = vadd.f32 %v576, %v800
  %802 = vmatmul.f32.gmra.mxu0 %v592
  %v803 = vpop.f32.mrf.mxu0
  %v804 = vadd.f32 %v576, %v803
  %805 = vmatmul.f32.gmra.mxu0 %v595
  %v806 = vpop.f32.mrf.mxu0
  %v807 = vadd.f32 %v576, %v806
  %808 = vmatmul.f32.gmra.mxu0 %v598
  %v809 = vpop.f32.mrf.mxu0
  %v810 = vadd.f32 %v576, %v809
  %811 = vmatmul.f32.gmra.mxu0 %v601
  %v812 = vpop.f32.mrf.mxu0
  %v813 = vadd.f32 %v576, %v812
  %814 = vmatmul.f32.gmra.mxu0 %v604
  %v815 = vpop.f32.mrf.mxu0
  %v816 = vadd.f32 %v576, %v815
  %817 = vmatmul.f32.gmra.mxu0 %v607
  %v818 = vpop.f32.mrf.mxu0
  %v819 = vadd.f32 %v576, %v818
  %820 = vmatmul.f32.gmra.mxu0 %v610
  %v821 = vpop.f32.mrf.mxu0
  %v822 = vadd.f32 %v576, %v821
  %823 = vmatmul.f32.gmra.mxu0 %v613
  %v824 = vpop.f32.mrf.mxu0
  %v825 = vadd.f32 %v576, %v824
  %826 = vmatmul.f32.gmra.mxu0 %v616
  %v827 = vpop.f32.mrf.mxu0
  %v828 = vadd.f32 %v576, %v827
  %829 = vmatmul.f32.gmra.mxu0 %v619
  %v830 = vpop.f32.mrf.mxu0
  %v831 = vadd.f32 %v576, %v830
  %832 = vmatmul.f32.gmra.mxu0 %v622
  %v833 = vpop.f32.mrf.mxu0
  %v834 = vadd.f32 %v576, %v833
  %835 = vmatmul.f32.gmra.mxu0 %v625
  %v836 = vpop.f32.mrf.mxu0
  %v837 = vadd.f32 %v576, %v836
  %838 = vmatmul.f32.gmra.mxu0 %v628
  %v839 = vpop.f32.mrf.mxu0
  %v840 = vadd.f32 %v576, %v839
  %841 = vmatmul.f32.gmra.mxu0 %v631
  %v842 = vpop.f32.mrf.mxu0
  %v843 = vadd.f32 %v576, %v842
  %844 = vmatmul.f32.gmra.mxu0 %v634
  %v845 = vpop.f32.mrf.mxu0
  %v846 = vadd.f32 %v576, %v845
  %847 = vmatmul.f32.gmra.mxu0 %v637
  %v848 = vpop.f32.mrf.mxu0
  %v849 = vadd.f32 %v576, %v848
  %850 = vmatmul.f32.gmra.mxu0 %v640
  %v851 = vpop.f32.mrf.mxu0
  %v852 = vadd.f32 %v576, %v851
  %853 = vmatmul.f32.gmra.mxu0 %v643
  %v854 = vpop.f32.mrf.mxu0
  %v855 = vadd.f32 %v576, %v854
  %856 = vmatmul.f32.gmra.mxu0 %v646
  %v857 = vpop.f32.mrf.mxu0
  %v858 = vadd.f32 %v576, %v857
  %859 = vmatmul.f32.gmra.mxu0 %v649
  %v860 = vpop.f32.mrf.mxu0
  %v861 = vadd.f32 %v576, %v860
  %862 = vmatmul.f32.gmra.mxu0 %v652
  %v863 = vpop.f32.mrf.mxu0
  %v864 = vadd.f32 %v576, %v863
  %865 = vmatmul.f32.gmra.mxu0 %v655
  %v866 = vpop.f32.mrf.mxu0
  %v867 = vadd.f32 %v576, %v866
  %868 = vmatmul.f32.gmra.mxu0 %v658
  %v869 = vpop.f32.mrf.mxu0
  %v870 = vadd.f32 %v576, %v869
  %871 = vmatmul.f32.gmra.mxu0 %v661
  %v872 = vpop.f32.mrf.mxu0
  %v873 = vadd.f32 %v576, %v872
  %874 = vmatmul.f32.gmra.mxu0 %v664
  %v875 = vpop.f32.mrf.mxu0
  %v876 = vadd.f32 %v576, %v875
  %877 = vmatmul.f32.gmra.mxu0 %v667
  %v878 = vpop.f32.mrf.mxu0
  %v879 = vadd.f32 %v576, %v878
  %880 = vmatmul.f32.gmra.mxu0 %v670
  %v881 = vpop.f32.mrf.mxu0
  %v882 = vadd.f32 %v576, %v881
  %883 = vmatmul.f32.gmra.mxu0 %v673
  %v884 = vpop.f32.mrf.mxu0
  %v885 = vadd.f32 %v576, %v884
  %886 = vmatmul.f32.gmra.mxu0 %v676
  %v887 = vpop.f32.mrf.mxu0
  %v888 = vadd.f32 %v576, %v887
  %889 = vmatmul.f32.gmra.mxu0 %v679
  %v890 = vpop.f32.mrf.mxu0
  %v891 = vadd.f32 %v576, %v890
  %892 = vmatmul.f32.gmra.mxu0 %v682
  %v893 = vpop.f32.mrf.mxu0
  %v894 = vadd.f32 %v576, %v893
  %895 = vmatmul.f32.gmra.mxu0 %v685
  %v896 = vpop.f32.mrf.mxu0
  %v897 = vadd.f32 %v576, %v896
  %898 = vmatmul.f32.gmra.mxu0 %v688
  %v899 = vpop.f32.mrf.mxu0
  %v900 = vadd.f32 %v576, %v899
  %901 = vmatmul.f32.gmra.mxu0 %v691
  %v902 = vpop.f32.mrf.mxu0
  %v903 = vadd.f32 %v576, %v902
  %904 = vmatmul.f32.gmra.mxu0 %v694
  %v905 = vpop.f32.mrf.mxu0
  %v906 = vadd.f32 %v576, %v905
  %907 = vmatmul.f32.gmra.mxu0 %v697
  %v908 = vpop.f32.mrf.mxu0
  %v909 = vadd.f32 %v576, %v908
  %910 = vmatmul.f32.gmra.mxu0 %v700
  %v911 = vpop.f32.mrf.mxu0
  %v912 = vadd.f32 %v576, %v911
  %913 = vmatmul.f32.gmra.mxu0 %v703
  %v914 = vpop.f32.mrf.mxu0
  %v915 = vadd.f32 %v576, %v914
  %916 = vmatmul.f32.gmra.mxu0 %v706
  %v917 = vpop.f32.mrf.mxu0
  %v918 = vadd.f32 %v576, %v917
  %919 = vmatmul.f32.gmra.mxu0 %v709
  %v920 = vpop.f32.mrf.mxu0
  %v921 = vadd.f32 %v576, %v920
  %922 = vmatmul.f32.gmra.mxu0 %v712
  %v923 = vpop.f32.mrf.mxu0
  %v924 = vadd.f32 %v576, %v923
  %925 = vmatmul.f32.gmra.mxu0 %v715
  %v926 = vpop.f32.mrf.mxu0
  %v927 = vadd.f32 %v576, %v926
  %928 = vmatmul.f32.gmra.mxu0 %v718
  %v929 = vpop.f32.mrf.mxu0
  %v930 = vadd.f32 %v576, %v929
  %931 = vmatmul.f32.gmra.mxu0 %v721
  %v932 = vpop.f32.mrf.mxu0
  %v933 = vadd.f32 %v576, %v932
  %934 = vmatmul.f32.gmra.mxu0 %v724
  %v935 = vpop.f32.mrf.mxu0
  %v936 = vadd.f32 %v576, %v935
  %937 = vmatmul.f32.gmra.mxu0 %v727
  %v938 = vpop.f32.mrf.mxu0
  %v939 = vadd.f32 %v576, %v938
  %940 = vmatmul.f32.gmra.mxu0 %v730
  %v941 = vpop.f32.mrf.mxu0
  %v942 = vadd.f32 %v576, %v941
  %943 = vmatmul.f32.gmra.mxu0 %v733
  %v944 = vpop.f32.mrf.mxu0
  %v945 = vadd.f32 %v576, %v944
  %946 = vmatmul.f32.gmra.mxu0 %v736
  %v947 = vpop.f32.mrf.mxu0
  %v948 = vadd.f32 %v576, %v947
  %949 = vmatmul.f32.gmra.mxu0 %v739
  %v950 = vpop.f32.mrf.mxu0
  %v951 = vadd.f32 %v576, %v950
  %952 = vmatmul.f32.gmra.mxu0 %v742
  %v953 = vpop.f32.mrf.mxu0
  %v954 = vadd.f32 %v576, %v953
  %955 = vmatmul.f32.gmra.mxu0 %v745
  %v956 = vpop.f32.mrf.mxu0
  %v957 = vadd.f32 %v576, %v956
  %958 = vmatmul.f32.gmra.mxu0 %v748
  %v959 = vpop.f32.mrf.mxu0
  %v960 = vadd.f32 %v576, %v959
  %961 = vmatmul.f32.gmra.mxu0 %v751
  %v962 = vpop.f32.mrf.mxu0
  %v963 = vadd.f32 %v576, %v962
  %964 = vmatmul.f32.gmra.mxu0 %v754
  %v965 = vpop.f32.mrf.mxu0
  %v966 = vadd.f32 %v576, %v965
  %967 = vmatmul.f32.gmra.mxu0 %v757
  %v968 = vpop.f32.mrf.mxu0
  %v969 = vadd.f32 %v576, %v968
  %970 = vmatmul.f32.gmra.mxu0 %v760
  %v971 = vpop.f32.mrf.mxu0
  %v972 = vadd.f32 %v576, %v971
  %973 = vmatmul.f32.gmra.mxu0 %v763
  %v974 = vpop.f32.mrf.mxu0
  %v975 = vadd.f32 %v576, %v974
  %976 = vmatmul.f32.gmra.mxu0 %v766
  %v977 = vpop.f32.mrf.mxu0
  %v978 = vadd.f32 %v576, %v977
  %979 = vdwg.mxu0
  %v980 = vmax.f32 %v792, 0.0
  %v981 = vmax.f32 %v795, 0.0
  %v982 = vmax.f32 %v798, 0.0
  %v983 = vmax.f32 %v801, 0.0
  %v984 = vmax.f32 %v804, 0.0
  %v985 = vmax.f32 %v807, 0.0
  %v986 = vmax.f32 %v810, 0.0
  %v987 = vmax.f32 %v813, 0.0
  %v988 = vmax.f32 %v816, 0.0
  %v989 = vmax.f32 %v819, 0.0
  %v990 = vmax.f32 %v822, 0.0
  %v991 = vmax.f32 %v825, 0.0
  %v992 = vmax.f32 %v828, 0.0
  %v993 = vmax.f32 %v831, 0.0
  %v994 = vmax.f32 %v834, 0.0
  %v995 = vmax.f32 %v837, 0.0
  %v996 = vmax.f32 %v840, 0.0
  %v997 = vmax.f32 %v843, 0.0
  %v998 = vmax.f32 %v846, 0.0
  %v999 = vmax.f32 %v849, 0.0
  %v1000 = vmax.f32 %v852, 0.0
  %v1001 = vmax.f32 %v855, 0.0
  %v1002 = vmax.f32 %v858, 0.0
  %v1003 = vmax.f32 %v861, 0.0
  %v1004 = vmax.f32 %v864, 0.0
  %v1005 = vmax.f32 %v867, 0.0
  %v1006 = vmax.f32 %v870, 0.0
  %v1007 = vmax.f32 %v873, 0.0
  %v1008 = vmax.f32 %v876, 0.0
  %v1009 = vmax.f32 %v879, 0.0
  %v1010 = vmax.f32 %v882, 0.0
  %v1011 = vmax.f32 %v885, 0.0
  %v1012 = vmax.f32 %v888, 0.0
  %v1013 = vmax.f32 %v891, 0.0
  %v1014 = vmax.f32 %v894, 0.0
  %v1015 = vmax.f32 %v897, 0.0
  %v1016 = vmax.f32 %v900, 0.0
  %v1017 = vmax.f32 %v903, 0.0
  %v1018 = vmax.f32 %v906, 0.0
  %v1019 = vmax.f32 %v909, 0.0
  %v1020 = vmax.f32 %v912, 0.0
  %v1021 = vmax.f32 %v915, 0.0
  %v1022 = vmax.f32 %v918, 0.0
  %v1023 = vmax.f32 %v921, 0.0
  %v1024 = vmax.f32 %v924, 0.0
  %v1025 = vmax.f32 %v927, 0.0
  %v1026 = vmax.f32 %v930, 0.0
  %v1027 = vmax.f32 %v933, 0.0
  %v1028 = vmax.f32 %v936, 0.0
  %v1029 = vmax.f32 %v939, 0.0
  %v1030 = vmax.f32 %v942, 0.0
  %v1031 = vmax.f32 %v945, 0.0
  %v1032 = vmax.f32 %v948, 0.0
  %v1033 = vmax.f32 %v951, 0.0
  %v1034 = vmax.f32 %v954, 0.0
  %v1035 = vmax.f32 %v957, 0.0
  %v1036 = vmax.f32 %v960, 0.0
  %v1037 = vmax.f32 %v963, 0.0
  %v1038 = vmax.f32 %v966, 0.0
  %v1039 = vmax.f32 %v969, 0.0
  %v1040 = vmax.f32 %v972, 0.0
  %v1041 = vmax.f32 %v975, 0.0
  %v1042 = vmax.f32 %v978, 0.0
  %v1043 = vld [vmem:[%s5] sm:$0xff]
  %v1044 = vld [vmem:[%s5 + $0x8] sm:$0xff]
  %v1045 = vld [vmem:[%s6] sm:$0x1]
  %v1047 = vperm.slane %v1045, 0
  %v1050 = vsel %vm578, %v980, 0
  %v1053 = vsel %vm578, %v981, 0
  %v1056 = vsel %vm578, %v982, 0
  %v1059 = vsel %vm578, %v983, 0
  %v1062 = vsel %vm578, %v984, 0
  %v1065 = vsel %vm578, %v985, 0
  %v1068 = vsel %vm578, %v986, 0
  %v1071 = vsel %vm578, %v987, 0
  %v1074 = vsel %vm578, %v988, 0
  %v1077 = vsel %vm578, %v989, 0
  %v1080 = vsel %vm578, %v990, 0
  %v1083 = vsel %vm578, %v991, 0
  %v1086 = vsel %vm578, %v992, 0
  %v1089 = vsel %vm578, %v993, 0
  %v1092 = vsel %vm578, %v994, 0
  %v1095 = vsel %vm578, %v995, 0
  %v1098 = vsel %vm578, %v996, 0
  %v1101 = vsel %vm578, %v997, 0
  %v1104 = vsel %vm578, %v998, 0
  %v1107 = vsel %vm578, %v999, 0
  %v1110 = vsel %vm578, %v1000, 0
  %v1113 = vsel %vm578, %v1001, 0
  %v1116 = vsel %vm578, %v1002, 0
  %v1119 = vsel %vm578, %v1003, 0
  %v1122 = vsel %vm578, %v1004, 0
  %v1125 = vsel %vm578, %v1005, 0
  %v1128 = vsel %vm578, %v1006, 0
  %v1131 = vsel %vm578, %v1007, 0
  %v1134 = vsel %vm578, %v1008, 0
  %v1137 = vsel %vm578, %v1009, 0
  %v1140 = vsel %vm578, %v1010, 0
  %v1143 = vsel %vm578, %v1011, 0
  %v1146 = vsel %vm578, %v1012, 0
  %v1149 = vsel %vm578, %v1013, 0
  %v1152 = vsel %vm578, %v1014, 0
  %v1155 = vsel %vm578, %v1015, 0
  %v1158 = vsel %vm578, %v1016, 0
  %v1161 = vsel %vm578, %v1017, 0
  %v1164 = vsel %vm578, %v1018, 0
  %v1167 = vsel %vm578, %v1019, 0
  %v1170 = vsel %vm578, %v1020, 0
  %v1173 = vsel %vm578, %v1021, 0
  %v1176 = vsel %vm578, %v1022, 0
  %v1179 = vsel %vm578, %v1023, 0
  %v1182 = vsel %vm578, %v1024, 0
  %v1185 = vsel %vm578, %v1025, 0
  %v1188 = vsel %vm578, %v1026, 0
  %v1191 = vsel %vm578, %v1027, 0
  %v1194 = vsel %vm578, %v1028, 0
  %v1197 = vsel %vm578, %v1029, 0
  %v1200 = vsel %vm578, %v1030, 0
  %v1203 = vsel %vm578, %v1031, 0
  %v1206 = vsel %vm578, %v1032, 0
  %v1209 = vsel %vm578, %v1033, 0
  %v1212 = vsel %vm578, %v1034, 0
  %v1215 = vsel %vm578, %v1035, 0
  %v1218 = vsel %vm578, %v1036, 0
  %v1221 = vsel %vm578, %v1037, 0
  %v1224 = vsel %vm578, %v1038, 0
  %v1227 = vsel %vm578, %v1039, 0
  %v1230 = vsel %vm578, %v1040, 0
  %v1233 = vsel %vm578, %v1041, 0
  %v1236 = vsel %vm578, %v1042, 0
  %v1239 = vsel %vm578, %v1043, 0
  %v1242 = vsel %vm578, %v1044, 0
  %1244 = vmatpush.xpose.msra.mxu0 0.0
  %1245 = vmatpush.xpose.msra.mxu0 0.0
  %1246 = vmatpush.xpose.msra.mxu0 0.0
  %1247 = vmatpush.xpose.msra.mxu0 0.0
  %1248 = vmatpush.xpose.msra.mxu0 0.0
  %1249 = vmatpush.xpose.msra.mxu0 0.0
  %1250 = vmatpush.xpose.msra.mxu0 0.0
  %1251 = vmatpush.xpose.msra.mxu0 0.0
  %1252 = vmatpush.xpose.msra.mxu0 0.0
  %1253 = vmatpush.xpose.msra.mxu0 0.0
  %1254 = vmatpush.xpose.msra.mxu0 0.0
  %1255 = vmatpush.xpose.msra.mxu0 0.0
  %1256 = vmatpush.xpose.msra.mxu0 0.0
  %1257 = vmatpush.xpose.msra.mxu0 0.0
  %1258 = vmatpush.xpose.msra.mxu0 %v1242
  %1259 = vmatpush.xpose.msra.mxu0 %v1239
  %1260 = vmatmul.f32.gmra.mxu0 %v1050
  %v1261 = vpop.f32.mrf.mxu0
  %v1262 = vadd.f32 %v1047, %v1261
  %1263 = vmatmul.f32.gmra.mxu0 %v1053
  %v1264 = vpop.f32.mrf.mxu0
  %v1265 = vadd.f32 %v1047, %v1264
  %1266 = vmatmul.f32.gmra.mxu0 %v1056
  %v1267 = vpop.f32.mrf.mxu0
  %v1268 = vadd.f32 %v1047, %v1267
  %1269 = vmatmul.f32.gmra.mxu0 %v1059
  %v1270 = vpop.f32.mrf.mxu0
  %v1271 = vadd.f32 %v1047, %v1270
  %1272 = vmatmul.f32.gmra.mxu0 %v1062
  %v1273 = vpop.f32.mrf.mxu0
  %v1274 = vadd.f32 %v1047, %v1273
  %1275 = vmatmul.f32.gmra.mxu0 %v1065
  %v1276 = vpop.f32.mrf.mxu0
  %v1277 = vadd.f32 %v1047, %v1276
  %1278 = vmatmul.f32.gmra.mxu0 %v1068
  %v1279 = vpop.f32.mrf.mxu0
  %v1280 = vadd.f32 %v1047, %v1279
  %1281 = vmatmul.f32.gmra.mxu0 %v1071
  %v1282 = vpop.f32.mrf.mxu0
  %v1283 = vadd.f32 %v1047, %v1282
  %1284 = vmatmul.f32.gmra.mxu0 %v1074
  %v1285 = vpop.f32.mrf.mxu0
  %v1286 = vadd.f32 %v1047, %v1285
  %1287 = vmatmul.f32.gmra.mxu0 %v1077
  %v1288 = vpop.f32.mrf.mxu0
  %v1289 = vadd.f32 %v1047, %v1288
  %1290 = vmatmul.f32.gmra.mxu0 %v1080
  %v1291 = vpop.f32.mrf.mxu0
  %v1292 = vadd.f32 %v1047, %v1291
  %1293 = vmatmul.f32.gmra.mxu0 %v1083
  %v1294 = vpop.f32.mrf.mxu0
  %v1295 = vadd.f32 %v1047, %v1294
  %1296 = vmatmul.f32.gmra.mxu0 %v1086
  %v1297 = vpop.f32.mrf.mxu0
  %v1298 = vadd.f32 %v1047, %v1297
  %1299 = vmatmul.f32.gmra.mxu0 %v1089
  %v1300 = vpop.f32.mrf.mxu0
  %v1301 = vadd.f32 %v1047, %v1300
  %1302 = vmatmul.f32.gmra.mxu0 %v1092
  %v1303 = vpop.f32.mrf.mxu0
  %v1304 = vadd.f32 %v1047, %v1303
  %1305 = vmatmul.f32.gmra.mxu0 %v1095
  %v1306 = vpop.f32.mrf.mxu0
  %v1307 = vadd.f32 %v1047, %v1306
  %1308 = vmatmul.f32.gmra.mxu0 %v1098
  %v1309 = vpop.f32.mrf.mxu0
  %v1310 = vadd.f32 %v1047, %v1309
  %1311 = vmatmul.f32.gmra.mxu0 %v1101
  %v1312 = vpop.f32.mrf.mxu0
  %v1313 = vadd.f32 %v1047, %v1312
  %1314 = vmatmul.f32.gmra.mxu0 %v1104
  %v1315 = vpop.f32.mrf.mxu0
  %v1316 = vadd.f32 %v1047, %v1315
  %1317 = vmatmul.f32.gmra.mxu0 %v1107
  %v1318 = vpop.f32.mrf.mxu0
  %v1319 = vadd.f32 %v1047, %v1318
  %1320 = vmatmul.f32.gmra.mxu0 %v1110
  %v1321 = vpop.f32.mrf.mxu0
  %v1322 = vadd.f32 %v1047, %v1321
  %1323 = vmatmul.f32.gmra.mxu0 %v1113
  %v1324 = vpop.f32.mrf.mxu0
  %v1325 = vadd.f32 %v1047, %v1324
  %1326 = vmatmul.f32.gmra.mxu0 %v1116
  %v1327 = vpop.f32.mrf.mxu0
  %v1328 = vadd.f32 %v1047, %v1327
  %1329 = vmatmul.f32.gmra.mxu0 %v1119
  %v1330 = vpop.f32.mrf.mxu0
  %v1331 = vadd.f32 %v1047, %v1330
  %1332 = vmatmul.f32.gmra.mxu0 %v1122
  %v1333 = vpop.f32.mrf.mxu0
  %v1334 = vadd.f32 %v1047, %v1333
  %1335 = vmatmul.f32.gmra.mxu0 %v1125
  %v1336 = vpop.f32.mrf.mxu0
  %v1337 = vadd.f32 %v1047, %v1336
  %1338 = vmatmul.f32.gmra.mxu0 %v1128
  %v1339 = vpop.f32.mrf.mxu0
  %v1340 = vadd.f32 %v1047, %v1339
  %1341 = vmatmul.f32.gmra.mxu0 %v1131
  %v1342 = vpop.f32.mrf.mxu0
  %v1343 = vadd.f32 %v1047, %v1342
  %1344 = vmatmul.f32.gmra.mxu0 %v1134
  %v1345 = vpop.f32.mrf.mxu0
  %v1346 = vadd.f32 %v1047, %v1345
  %1347 = vmatmul.f32.gmra.mxu0 %v1137
  %v1348 = vpop.f32.mrf.mxu0
  %v1349 = vadd.f32 %v1047, %v1348
  %1350 = vmatmul.f32.gmra.mxu0 %v1140
  %v1351 = vpop.f32.mrf.mxu0
  %v1352 = vadd.f32 %v1047, %v1351
  %1353 = vmatmul.f32.gmra.mxu0 %v1143
  %v1354 = vpop.f32.mrf.mxu0
  %v1355 = vadd.f32 %v1047, %v1354
  %1356 = vmatmul.f32.gmra.mxu0 %v1146
  %v1357 = vpop.f32.mrf.mxu0
  %v1358 = vadd.f32 %v1047, %v1357
  %1359 = vmatmul.f32.gmra.mxu0 %v1149
  %v1360 = vpop.f32.mrf.mxu0
  %v1361 = vadd.f32 %v1047, %v1360
  %1362 = vmatmul.f32.gmra.mxu0 %v1152
  %v1363 = vpop.f32.mrf.mxu0
  %v1364 = vadd.f32 %v1047, %v1363
  %1365 = vmatmul.f32.gmra.mxu0 %v1155
  %v1366 = vpop.f32.mrf.mxu0
  %v1367 = vadd.f32 %v1047, %v1366
  %1368 = vmatmul.f32.gmra.mxu0 %v1158
  %v1369 = vpop.f32.mrf.mxu0
  %v1370 = vadd.f32 %v1047, %v1369
  %1371 = vmatmul.f32.gmra.mxu0 %v1161
  %v1372 = vpop.f32.mrf.mxu0
  %v1373 = vadd.f32 %v1047, %v1372
  %1374 = vmatmul.f32.gmra.mxu0 %v1164
  %v1375 = vpop.f32.mrf.mxu0
  %v1376 = vadd.f32 %v1047, %v1375
  %1377 = vmatmul.f32.gmra.mxu0 %v1167
  %v1378 = vpop.f32.mrf.mxu0
  %v1379 = vadd.f32 %v1047, %v1378
  %1380 = vmatmul.f32.gmra.mxu0 %v1170
  %v1381 = vpop.f32.mrf.mxu0
  %v1382 = vadd.f32 %v1047, %v1381
  %1383 = vmatmul.f32.gmra.mxu0 %v1173
  %v1384 = vpop.f32.mrf.mxu0
  %v1385 = vadd.f32 %v1047, %v1384
  %1386 = vmatmul.f32.gmra.mxu0 %v1176
  %v1387 = vpop.f32.mrf.mxu0
  %v1388 = vadd.f32 %v1047, %v1387
  %1389 = vmatmul.f32.gmra.mxu0 %v1179
  %v1390 = vpop.f32.mrf.mxu0
  %v1391 = vadd.f32 %v1047, %v1390
  %1392 = vmatmul.f32.gmra.mxu0 %v1182
  %v1393 = vpop.f32.mrf.mxu0
  %v1394 = vadd.f32 %v1047, %v1393
  %1395 = vmatmul.f32.gmra.mxu0 %v1185
  %v1396 = vpop.f32.mrf.mxu0
  %v1397 = vadd.f32 %v1047, %v1396
  %1398 = vmatmul.f32.gmra.mxu0 %v1188
  %v1399 = vpop.f32.mrf.mxu0
  %v1400 = vadd.f32 %v1047, %v1399
  %1401 = vmatmul.f32.gmra.mxu0 %v1191
  %v1402 = vpop.f32.mrf.mxu0
  %v1403 = vadd.f32 %v1047, %v1402
  %1404 = vmatmul.f32.gmra.mxu0 %v1194
  %v1405 = vpop.f32.mrf.mxu0
  %v1406 = vadd.f32 %v1047, %v1405
  %1407 = vmatmul.f32.gmra.mxu0 %v1197
  %v1408 = vpop.f32.mrf.mxu0
  %v1409 = vadd.f32 %v1047, %v1408
  %1410 = vmatmul.f32.gmra.mxu0 %v1200
  %v1411 = vpop.f32.mrf.mxu0
  %v1412 = vadd.f32 %v1047, %v1411
  %1413 = vmatmul.f32.gmra.mxu0 %v1203
  %v1414 = vpop.f32.mrf.mxu0
  %v1415 = vadd.f32 %v1047, %v1414
  %1416 = vmatmul.f32.gmra.mxu0 %v1206
  %v1417 = vpop.f32.mrf.mxu0
  %v1418 = vadd.f32 %v1047, %v1417
  %1419 = vmatmul.f32.gmra.mxu0 %v1209
  %v1420 = vpop.f32.mrf.mxu0
  %v1421 = vadd.f32 %v1047, %v1420
  %1422 = vmatmul.f32.gmra.mxu0 %v1212
  %v1423 = vpop.f32.mrf.mxu0
  %v1424 = vadd.f32 %v1047, %v1423
  %1425 = vmatmul.f32.gmra.mxu0 %v1215
  %v1426 = vpop.f32.mrf.mxu0
  %v1427 = vadd.f32 %v1047, %v1426
  %1428 = vmatmul.f32.gmra.mxu0 %v1218
  %v1429 = vpop.f32.mrf.mxu0
  %v1430 = vadd.f32 %v1047, %v1429
  %1431 = vmatmul.f32.gmra.mxu0 %v1221
  %v1432 = vpop.f32.mrf.mxu0
  %v1433 = vadd.f32 %v1047, %v1432
  %1434 = vmatmul.f32.gmra.mxu0 %v1224
  %v1435 = vpop.f32.mrf.mxu0
  %v1436 = vadd.f32 %v1047, %v1435
  %1437 = vmatmul.f32.gmra.mxu0 %v1227
  %v1438 = vpop.f32.mrf.mxu0
  %v1439 = vadd.f32 %v1047, %v1438
  %1440 = vmatmul.f32.gmra.mxu0 %v1230
  %v1441 = vpop.f32.mrf.mxu0
  %v1442 = vadd.f32 %v1047, %v1441
  %1443 = vmatmul.f32.gmra.mxu0 %v1233
  %v1444 = vpop.f32.mrf.mxu0
  %v1445 = vadd.f32 %v1047, %v1444
  %1446 = vmatmul.f32.gmra.mxu0 %v1236
  %v1447 = vpop.f32.mrf.mxu0
  %v1448 = vadd.f32 %v1047, %v1447
  %1449 = vdwg.mxu0
  %v1450 = vmax.f32 %v1262, 0.0
  %v1451 = vmax.f32 %v1265, 0.0
  %v1452 = vmax.f32 %v1268, 0.0
  %v1453 = vmax.f32 %v1271, 0.0
  %v1454 = vmax.f32 %v1274, 0.0
  %v1455 = vmax.f32 %v1277, 0.0
  %v1456 = vmax.f32 %v1280, 0.0
  %v1457 = vmax.f32 %v1283, 0.0
  %v1458 = vmax.f32 %v1286, 0.0
  %v1459 = vmax.f32 %v1289, 0.0
  %v1460 = vmax.f32 %v1292, 0.0
  %v1461 = vmax.f32 %v1295, 0.0
  %v1462 = vmax.f32 %v1298, 0.0
  %v1463 = vmax.f32 %v1301, 0.0
  %v1464 = vmax.f32 %v1304, 0.0
  %v1465 = vmax.f32 %v1307, 0.0
  %v1466 = vmax.f32 %v1310, 0.0
  %v1467 = vmax.f32 %v1313, 0.0
  %v1468 = vmax.f32 %v1316, 0.0
  %v1469 = vmax.f32 %v1319, 0.0
  %v1470 = vmax.f32 %v1322, 0.0
  %v1471 = vmax.f32 %v1325, 0.0
  %v1472 = vmax.f32 %v1328, 0.0
  %v1473 = vmax.f32 %v1331, 0.0
  %v1474 = vmax.f32 %v1334, 0.0
  %v1475 = vmax.f32 %v1337, 0.0
  %v1476 = vmax.f32 %v1340, 0.0
  %v1477 = vmax.f32 %v1343, 0.0
  %v1478 = vmax.f32 %v1346, 0.0
  %v1479 = vmax.f32 %v1349, 0.0
  %v1480 = vmax.f32 %v1352, 0.0
  %v1481 = vmax.f32 %v1355, 0.0
  %v1482 = vmax.f32 %v1358, 0.0
  %v1483 = vmax.f32 %v1361, 0.0
  %v1484 = vmax.f32 %v1364, 0.0
  %v1485 = vmax.f32 %v1367, 0.0
  %v1486 = vmax.f32 %v1370, 0.0
  %v1487 = vmax.f32 %v1373, 0.0
  %v1488 = vmax.f32 %v1376, 0.0
  %v1489 = vmax.f32 %v1379, 0.0
  %v1490 = vmax.f32 %v1382, 0.0
  %v1491 = vmax.f32 %v1385, 0.0
  %v1492 = vmax.f32 %v1388, 0.0
  %v1493 = vmax.f32 %v1391, 0.0
  %v1494 = vmax.f32 %v1394, 0.0
  %v1495 = vmax.f32 %v1397, 0.0
  %v1496 = vmax.f32 %v1400, 0.0
  %v1497 = vmax.f32 %v1403, 0.0
  %v1498 = vmax.f32 %v1406, 0.0
  %v1499 = vmax.f32 %v1409, 0.0
  %v1500 = vmax.f32 %v1412, 0.0
  %v1501 = vmax.f32 %v1415, 0.0
  %v1502 = vmax.f32 %v1418, 0.0
  %v1503 = vmax.f32 %v1421, 0.0
  %v1504 = vmax.f32 %v1424, 0.0
  %v1505 = vmax.f32 %v1427, 0.0
  %v1506 = vmax.f32 %v1430, 0.0
  %v1507 = vmax.f32 %v1433, 0.0
  %v1508 = vmax.f32 %v1436, 0.0
  %v1509 = vmax.f32 %v1439, 0.0
  %v1510 = vmax.f32 %v1442, 0.0
  %v1511 = vmax.f32 %v1445, 0.0
  %v1512 = vmax.f32 %v1448, 0.0
  %v1513 = vld [vmem:[%s7] sm:$0xff]
  %v1514 = vld [vmem:[%s7 + $0x8] sm:$0xff]
  %v1515 = vld [vmem:[%s8] sm:$0x1]
  %v1517 = vperm.slane %v1515, 0
  %v1520 = vsel %vm578, %v1450, 0
  %v1523 = vsel %vm578, %v1451, 0
  %v1526 = vsel %vm578, %v1452, 0
  %v1529 = vsel %vm578, %v1453, 0
  %v1532 = vsel %vm578, %v1454, 0
  %v1535 = vsel %vm578, %v1455, 0
  %v1538 = vsel %vm578, %v1456, 0
  %v1541 = vsel %vm578, %v1457, 0
  %v1544 = vsel %vm578, %v1458, 0
  %v1547 = vsel %vm578, %v1459, 0
  %v1550 = vsel %vm578, %v1460, 0
  %v1553 = vsel %vm578, %v1461, 0
  %v1556 = vsel %vm578, %v1462, 0
  %v1559 = vsel %vm578, %v1463, 0
  %v1562 = vsel %vm578, %v1464, 0
  %v1565 = vsel %vm578, %v1465, 0
  %v1568 = vsel %vm578, %v1466, 0
  %v1571 = vsel %vm578, %v1467, 0
  %v1574 = vsel %vm578, %v1468, 0
  %v1577 = vsel %vm578, %v1469, 0
  %v1580 = vsel %vm578, %v1470, 0
  %v1583 = vsel %vm578, %v1471, 0
  %v1586 = vsel %vm578, %v1472, 0
  %v1589 = vsel %vm578, %v1473, 0
  %v1592 = vsel %vm578, %v1474, 0
  %v1595 = vsel %vm578, %v1475, 0
  %v1598 = vsel %vm578, %v1476, 0
  %v1601 = vsel %vm578, %v1477, 0
  %v1604 = vsel %vm578, %v1478, 0
  %v1607 = vsel %vm578, %v1479, 0
  %v1610 = vsel %vm578, %v1480, 0
  %v1613 = vsel %vm578, %v1481, 0
  %v1616 = vsel %vm578, %v1482, 0
  %v1619 = vsel %vm578, %v1483, 0
  %v1622 = vsel %vm578, %v1484, 0
  %v1625 = vsel %vm578, %v1485, 0
  %v1628 = vsel %vm578, %v1486, 0
  %v1631 = vsel %vm578, %v1487, 0
  %v1634 = vsel %vm578, %v1488, 0
  %v1637 = vsel %vm578, %v1489, 0
  %v1640 = vsel %vm578, %v1490, 0
  %v1643 = vsel %vm578, %v1491, 0
  %v1646 = vsel %vm578, %v1492, 0
  %v1649 = vsel %vm578, %v1493, 0
  %v1652 = vsel %vm578, %v1494, 0
  %v1655 = vsel %vm578, %v1495, 0
  %v1658 = vsel %vm578, %v1496, 0
  %v1661 = vsel %vm578, %v1497, 0
  %v1664 = vsel %vm578, %v1498, 0
  %v1667 = vsel %vm578, %v1499, 0
  %v1670 = vsel %vm578, %v1500, 0
  %v1673 = vsel %vm578, %v1501, 0
  %v1676 = vsel %vm578, %v1502, 0
  %v1679 = vsel %vm578, %v1503, 0
  %v1682 = vsel %vm578, %v1504, 0
  %v1685 = vsel %vm578, %v1505, 0
  %v1688 = vsel %vm578, %v1506, 0
  %v1691 = vsel %vm578, %v1507, 0
  %v1694 = vsel %vm578, %v1508, 0
  %v1697 = vsel %vm578, %v1509, 0
  %v1700 = vsel %vm578, %v1510, 0
  %v1703 = vsel %vm578, %v1511, 0
  %v1706 = vsel %vm578, %v1512, 0
  %v1709 = vsel %vm578, %v1513, 0
  %v1712 = vsel %vm578, %v1514, 0
  %1714 = vmatpush.xpose.msra.mxu0 0.0
  %1715 = vmatpush.xpose.msra.mxu0 0.0
  %1716 = vmatpush.xpose.msra.mxu0 0.0
  %1717 = vmatpush.xpose.msra.mxu0 0.0
  %1718 = vmatpush.xpose.msra.mxu0 0.0
  %1719 = vmatpush.xpose.msra.mxu0 0.0
  %1720 = vmatpush.xpose.msra.mxu0 0.0
  %1721 = vmatpush.xpose.msra.mxu0 0.0
  %1722 = vmatpush.xpose.msra.mxu0 0.0
  %1723 = vmatpush.xpose.msra.mxu0 0.0
  %1724 = vmatpush.xpose.msra.mxu0 0.0
  %1725 = vmatpush.xpose.msra.mxu0 0.0
  %1726 = vmatpush.xpose.msra.mxu0 0.0
  %1727 = vmatpush.xpose.msra.mxu0 0.0
  %1728 = vmatpush.xpose.msra.mxu0 %v1712
  %1729 = vmatpush.xpose.msra.mxu0 %v1709
  %1730 = vmatmul.f32.gmra.mxu0 %v1520
  %v1731 = vpop.f32.mrf.mxu0
  %v1732 = vadd.f32 %v1517, %v1731
  %1733 = vmatmul.f32.gmra.mxu0 %v1523
  %v1734 = vpop.f32.mrf.mxu0
  %v1735 = vadd.f32 %v1517, %v1734
  %1736 = vmatmul.f32.gmra.mxu0 %v1526
  %v1737 = vpop.f32.mrf.mxu0
  %v1738 = vadd.f32 %v1517, %v1737
  %1739 = vmatmul.f32.gmra.mxu0 %v1529
  %v1740 = vpop.f32.mrf.mxu0
  %v1741 = vadd.f32 %v1517, %v1740
  %1742 = vmatmul.f32.gmra.mxu0 %v1532
  %v1743 = vpop.f32.mrf.mxu0
  %v1744 = vadd.f32 %v1517, %v1743
  %1745 = vmatmul.f32.gmra.mxu0 %v1535
  %v1746 = vpop.f32.mrf.mxu0
  %v1747 = vadd.f32 %v1517, %v1746
  %1748 = vmatmul.f32.gmra.mxu0 %v1538
  %v1749 = vpop.f32.mrf.mxu0
  %v1750 = vadd.f32 %v1517, %v1749
  %1751 = vmatmul.f32.gmra.mxu0 %v1541
  %v1752 = vpop.f32.mrf.mxu0
  %v1753 = vadd.f32 %v1517, %v1752
  %1754 = vmatmul.f32.gmra.mxu0 %v1544
  %v1755 = vpop.f32.mrf.mxu0
  %v1756 = vadd.f32 %v1517, %v1755
  %1757 = vmatmul.f32.gmra.mxu0 %v1547
  %v1758 = vpop.f32.mrf.mxu0
  %v1759 = vadd.f32 %v1517, %v1758
  %1760 = vmatmul.f32.gmra.mxu0 %v1550
  %v1761 = vpop.f32.mrf.mxu0
  %v1762 = vadd.f32 %v1517, %v1761
  %1763 = vmatmul.f32.gmra.mxu0 %v1553
  %v1764 = vpop.f32.mrf.mxu0
  %v1765 = vadd.f32 %v1517, %v1764
  %1766 = vmatmul.f32.gmra.mxu0 %v1556
  %v1767 = vpop.f32.mrf.mxu0
  %v1768 = vadd.f32 %v1517, %v1767
  %1769 = vmatmul.f32.gmra.mxu0 %v1559
  %v1770 = vpop.f32.mrf.mxu0
  %v1771 = vadd.f32 %v1517, %v1770
  %1772 = vmatmul.f32.gmra.mxu0 %v1562
  %v1773 = vpop.f32.mrf.mxu0
  %v1774 = vadd.f32 %v1517, %v1773
  %1775 = vmatmul.f32.gmra.mxu0 %v1565
  %v1776 = vpop.f32.mrf.mxu0
  %v1777 = vadd.f32 %v1517, %v1776
  %1778 = vmatmul.f32.gmra.mxu0 %v1568
  %v1779 = vpop.f32.mrf.mxu0
  %v1780 = vadd.f32 %v1517, %v1779
  %1781 = vmatmul.f32.gmra.mxu0 %v1571
  %v1782 = vpop.f32.mrf.mxu0
  %v1783 = vadd.f32 %v1517, %v1782
  %1784 = vmatmul.f32.gmra.mxu0 %v1574
  %v1785 = vpop.f32.mrf.mxu0
  %v1786 = vadd.f32 %v1517, %v1785
  %1787 = vmatmul.f32.gmra.mxu0 %v1577
  %v1788 = vpop.f32.mrf.mxu0
  %v1789 = vadd.f32 %v1517, %v1788
  %1790 = vmatmul.f32.gmra.mxu0 %v1580
  %v1791 = vpop.f32.mrf.mxu0
  %v1792 = vadd.f32 %v1517, %v1791
  %1793 = vmatmul.f32.gmra.mxu0 %v1583
  %v1794 = vpop.f32.mrf.mxu0
  %v1795 = vadd.f32 %v1517, %v1794
  %1796 = vmatmul.f32.gmra.mxu0 %v1586
  %v1797 = vpop.f32.mrf.mxu0
  %v1798 = vadd.f32 %v1517, %v1797
  %1799 = vmatmul.f32.gmra.mxu0 %v1589
  %v1800 = vpop.f32.mrf.mxu0
  %v1801 = vadd.f32 %v1517, %v1800
  %1802 = vmatmul.f32.gmra.mxu0 %v1592
  %v1803 = vpop.f32.mrf.mxu0
  %v1804 = vadd.f32 %v1517, %v1803
  %1805 = vmatmul.f32.gmra.mxu0 %v1595
  %v1806 = vpop.f32.mrf.mxu0
  %v1807 = vadd.f32 %v1517, %v1806
  %1808 = vmatmul.f32.gmra.mxu0 %v1598
  %v1809 = vpop.f32.mrf.mxu0
  %v1810 = vadd.f32 %v1517, %v1809
  %1811 = vmatmul.f32.gmra.mxu0 %v1601
  %v1812 = vpop.f32.mrf.mxu0
  %v1813 = vadd.f32 %v1517, %v1812
  %1814 = vmatmul.f32.gmra.mxu0 %v1604
  %v1815 = vpop.f32.mrf.mxu0
  %v1816 = vadd.f32 %v1517, %v1815
  %1817 = vmatmul.f32.gmra.mxu0 %v1607
  %v1818 = vpop.f32.mrf.mxu0
  %v1819 = vadd.f32 %v1517, %v1818
  %1820 = vmatmul.f32.gmra.mxu0 %v1610
  %v1821 = vpop.f32.mrf.mxu0
  %v1822 = vadd.f32 %v1517, %v1821
  %1823 = vmatmul.f32.gmra.mxu0 %v1613
  %v1824 = vpop.f32.mrf.mxu0
  %v1825 = vadd.f32 %v1517, %v1824
  %1826 = vmatmul.f32.gmra.mxu0 %v1616
  %v1827 = vpop.f32.mrf.mxu0
  %v1828 = vadd.f32 %v1517, %v1827
  %1829 = vmatmul.f32.gmra.mxu0 %v1619
  %v1830 = vpop.f32.mrf.mxu0
  %v1831 = vadd.f32 %v1517, %v1830
  %1832 = vmatmul.f32.gmra.mxu0 %v1622
  %v1833 = vpop.f32.mrf.mxu0
  %v1834 = vadd.f32 %v1517, %v1833
  %1835 = vmatmul.f32.gmra.mxu0 %v1625
  %v1836 = vpop.f32.mrf.mxu0
  %v1837 = vadd.f32 %v1517, %v1836
  %1838 = vmatmul.f32.gmra.mxu0 %v1628
  %v1839 = vpop.f32.mrf.mxu0
  %v1840 = vadd.f32 %v1517, %v1839
  %1841 = vmatmul.f32.gmra.mxu0 %v1631
  %v1842 = vpop.f32.mrf.mxu0
  %v1843 = vadd.f32 %v1517, %v1842
  %1844 = vmatmul.f32.gmra.mxu0 %v1634
  %v1845 = vpop.f32.mrf.mxu0
  %v1846 = vadd.f32 %v1517, %v1845
  %1847 = vmatmul.f32.gmra.mxu0 %v1637
  %v1848 = vpop.f32.mrf.mxu0
  %v1849 = vadd.f32 %v1517, %v1848
  %1850 = vmatmul.f32.gmra.mxu0 %v1640
  %v1851 = vpop.f32.mrf.mxu0
  %v1852 = vadd.f32 %v1517, %v1851
  %1853 = vmatmul.f32.gmra.mxu0 %v1643
  %v1854 = vpop.f32.mrf.mxu0
  %v1855 = vadd.f32 %v1517, %v1854
  %1856 = vmatmul.f32.gmra.mxu0 %v1646
  %v1857 = vpop.f32.mrf.mxu0
  %v1858 = vadd.f32 %v1517, %v1857
  %1859 = vmatmul.f32.gmra.mxu0 %v1649
  %v1860 = vpop.f32.mrf.mxu0
  %v1861 = vadd.f32 %v1517, %v1860
  %1862 = vmatmul.f32.gmra.mxu0 %v1652
  %v1863 = vpop.f32.mrf.mxu0
  %v1864 = vadd.f32 %v1517, %v1863
  %1865 = vmatmul.f32.gmra.mxu0 %v1655
  %v1866 = vpop.f32.mrf.mxu0
  %v1867 = vadd.f32 %v1517, %v1866
  %1868 = vmatmul.f32.gmra.mxu0 %v1658
  %v1869 = vpop.f32.mrf.mxu0
  %v1870 = vadd.f32 %v1517, %v1869
  %1871 = vmatmul.f32.gmra.mxu0 %v1661
  %v1872 = vpop.f32.mrf.mxu0
  %v1873 = vadd.f32 %v1517, %v1872
  %1874 = vmatmul.f32.gmra.mxu0 %v1664
  %v1875 = vpop.f32.mrf.mxu0
  %v1876 = vadd.f32 %v1517, %v1875
  %1877 = vmatmul.f32.gmra.mxu0 %v1667
  %v1878 = vpop.f32.mrf.mxu0
  %v1879 = vadd.f32 %v1517, %v1878
  %1880 = vmatmul.f32.gmra.mxu0 %v1670
  %v1881 = vpop.f32.mrf.mxu0
  %v1882 = vadd.f32 %v1517, %v1881
  %1883 = vmatmul.f32.gmra.mxu0 %v1673
  %v1884 = vpop.f32.mrf.mxu0
  %v1885 = vadd.f32 %v1517, %v1884
  %1886 = vmatmul.f32.gmra.mxu0 %v1676
  %v1887 = vpop.f32.mrf.mxu0
  %v1888 = vadd.f32 %v1517, %v1887
  %1889 = vmatmul.f32.gmra.mxu0 %v1679
  %v1890 = vpop.f32.mrf.mxu0
  %v1891 = vadd.f32 %v1517, %v1890
  %1892 = vmatmul.f32.gmra.mxu0 %v1682
  %v1893 = vpop.f32.mrf.mxu0
  %v1894 = vadd.f32 %v1517, %v1893
  %1895 = vmatmul.f32.gmra.mxu0 %v1685
  %v1896 = vpop.f32.mrf.mxu0
  %v1897 = vadd.f32 %v1517, %v1896
  %1898 = vmatmul.f32.gmra.mxu0 %v1688
  %v1899 = vpop.f32.mrf.mxu0
  %v1900 = vadd.f32 %v1517, %v1899
  %1901 = vmatmul.f32.gmra.mxu0 %v1691
  %v1902 = vpop.f32.mrf.mxu0
  %v1903 = vadd.f32 %v1517, %v1902
  %1904 = vmatmul.f32.gmra.mxu0 %v1694
  %v1905 = vpop.f32.mrf.mxu0
  %v1906 = vadd.f32 %v1517, %v1905
  %1907 = vmatmul.f32.gmra.mxu0 %v1697
  %v1908 = vpop.f32.mrf.mxu0
  %v1909 = vadd.f32 %v1517, %v1908
  %1910 = vmatmul.f32.gmra.mxu0 %v1700
  %v1911 = vpop.f32.mrf.mxu0
  %v1912 = vadd.f32 %v1517, %v1911
  %1913 = vmatmul.f32.gmra.mxu0 %v1703
  %v1914 = vpop.f32.mrf.mxu0
  %v1915 = vadd.f32 %v1517, %v1914
  %1916 = vmatmul.f32.gmra.mxu0 %v1706
  %v1917 = vpop.f32.mrf.mxu0
  %v1918 = vadd.f32 %v1517, %v1917
  %1919 = vdwg.mxu0
  %v1920 = vadd.f32 %v321, %v1732
  %v1921 = vadd.f32 %v324, %v1735
  %v1922 = vadd.f32 %v327, %v1738
  %v1923 = vadd.f32 %v330, %v1741
  %v1924 = vadd.f32 %v333, %v1744
  %v1925 = vadd.f32 %v336, %v1747
  %v1926 = vadd.f32 %v339, %v1750
  %v1927 = vadd.f32 %v342, %v1753
  %v1928 = vadd.f32 %v345, %v1756
  %v1929 = vadd.f32 %v348, %v1759
  %v1930 = vadd.f32 %v351, %v1762
  %v1931 = vadd.f32 %v354, %v1765
  %v1932 = vadd.f32 %v357, %v1768
  %v1933 = vadd.f32 %v360, %v1771
  %v1934 = vadd.f32 %v363, %v1774
  %v1935 = vadd.f32 %v366, %v1777
  %v1936 = vadd.f32 %v369, %v1780
  %v1937 = vadd.f32 %v372, %v1783
  %v1938 = vadd.f32 %v375, %v1786
  %v1939 = vadd.f32 %v378, %v1789
  %v1940 = vadd.f32 %v381, %v1792
  %v1941 = vadd.f32 %v384, %v1795
  %v1942 = vadd.f32 %v387, %v1798
  %v1943 = vadd.f32 %v390, %v1801
  %v1944 = vadd.f32 %v393, %v1804
  %v1945 = vadd.f32 %v396, %v1807
  %v1946 = vadd.f32 %v399, %v1810
  %v1947 = vadd.f32 %v402, %v1813
  %v1948 = vadd.f32 %v405, %v1816
  %v1949 = vadd.f32 %v408, %v1819
  %v1950 = vadd.f32 %v411, %v1822
  %v1951 = vadd.f32 %v414, %v1825
  %v1952 = vadd.f32 %v417, %v1828
  %v1953 = vadd.f32 %v420, %v1831
  %v1954 = vadd.f32 %v423, %v1834
  %v1955 = vadd.f32 %v426, %v1837
  %v1956 = vadd.f32 %v429, %v1840
  %v1957 = vadd.f32 %v432, %v1843
  %v1958 = vadd.f32 %v435, %v1846
  %v1959 = vadd.f32 %v438, %v1849
  %v1960 = vadd.f32 %v441, %v1852
  %v1961 = vadd.f32 %v444, %v1855
  %v1962 = vadd.f32 %v447, %v1858
  %v1963 = vadd.f32 %v450, %v1861
  %v1964 = vadd.f32 %v453, %v1864
  %v1965 = vadd.f32 %v456, %v1867
  %v1966 = vadd.f32 %v459, %v1870
  %v1967 = vadd.f32 %v462, %v1873
  %v1968 = vadd.f32 %v465, %v1876
  %v1969 = vadd.f32 %v468, %v1879
  %v1970 = vadd.f32 %v471, %v1882
  %v1971 = vadd.f32 %v474, %v1885
  %v1972 = vadd.f32 %v477, %v1888
  %v1973 = vadd.f32 %v480, %v1891
  %v1974 = vadd.f32 %v483, %v1894
  %v1975 = vadd.f32 %v486, %v1897
  %v1976 = vadd.f32 %v489, %v1900
  %v1977 = vadd.f32 %v492, %v1903
  %v1978 = vadd.f32 %v495, %v1906
  %v1979 = vadd.f32 %v498, %v1909
  %v1980 = vadd.f32 %v501, %v1912
  %v1981 = vadd.f32 %v504, %v1915
  %v1982 = vadd.f32 %v507, %v1918
  %v1983 = vmax.f32 %v1920, 0.0
  %v1984 = vmax.f32 %v1921, 0.0
  %v1985 = vmax.f32 %v1922, 0.0
  %v1986 = vmax.f32 %v1923, 0.0
  %v1987 = vmax.f32 %v1924, 0.0
  %v1988 = vmax.f32 %v1925, 0.0
  %v1989 = vmax.f32 %v1926, 0.0
  %v1990 = vmax.f32 %v1927, 0.0
  %v1991 = vmax.f32 %v1928, 0.0
  %v1992 = vmax.f32 %v1929, 0.0
  %v1993 = vmax.f32 %v1930, 0.0
  %v1994 = vmax.f32 %v1931, 0.0
  %v1995 = vmax.f32 %v1932, 0.0
  %v1996 = vmax.f32 %v1933, 0.0
  %v1997 = vmax.f32 %v1934, 0.0
  %v1998 = vmax.f32 %v1935, 0.0
  %v1999 = vmax.f32 %v1936, 0.0
  %v2000 = vmax.f32 %v1937, 0.0
  %v2001 = vmax.f32 %v1938, 0.0
  %v2002 = vmax.f32 %v1939, 0.0
  %v2003 = vmax.f32 %v1940, 0.0
  %v2004 = vmax.f32 %v1941, 0.0
  %v2005 = vmax.f32 %v1942, 0.0
  %v2006 = vmax.f32 %v1943, 0.0
  %v2007 = vmax.f32 %v1944, 0.0
  %v2008 = vmax.f32 %v1945, 0.0
  %v2009 = vmax.f32 %v1946, 0.0
  %v2010 = vmax.f32 %v1947, 0.0
  %v2011 = vmax.f32 %v1948, 0.0
  %v2012 = vmax.f32 %v1949, 0.0
  %v2013 = vmax.f32 %v1950, 0.0
  %v2014 = vmax.f32 %v1951, 0.0
  %v2015 = vmax.f32 %v1952, 0.0
  %v2016 = vmax.f32 %v1953, 0.0
  %v2017 = vmax.f32 %v1954, 0.0
  %v2018 = vmax.f32 %v1955, 0.0
  %v2019 = vmax.f32 %v1956, 0.0
  %v2020 = vmax.f32 %v1957, 0.0
  %v2021 = vmax.f32 %v1958, 0.0
  %v2022 = vmax.f32 %v1959, 0.0
  %v2023 = vmax.f32 %v1960, 0.0
  %v2024 = vmax.f32 %v1961, 0.0
  %v2025 = vmax.f32 %v1962, 0.0
  %v2026 = vmax.f32 %v1963, 0.0
  %v2027 = vmax.f32 %v1964, 0.0
  %v2028 = vmax.f32 %v1965, 0.0
  %v2029 = vmax.f32 %v1966, 0.0
  %v2030 = vmax.f32 %v1967, 0.0
  %v2031 = vmax.f32 %v1968, 0.0
  %v2032 = vmax.f32 %v1969, 0.0
  %v2033 = vmax.f32 %v1970, 0.0
  %v2034 = vmax.f32 %v1971, 0.0
  %v2035 = vmax.f32 %v1972, 0.0
  %v2036 = vmax.f32 %v1973, 0.0
  %v2037 = vmax.f32 %v1974, 0.0
  %v2038 = vmax.f32 %v1975, 0.0
  %v2039 = vmax.f32 %v1976, 0.0
  %v2040 = vmax.f32 %v1977, 0.0
  %v2041 = vmax.f32 %v1978, 0.0
  %v2042 = vmax.f32 %v1979, 0.0
  %v2043 = vmax.f32 %v1980, 0.0
  %v2044 = vmax.f32 %v1981, 0.0
  %v2045 = vmax.f32 %v1982, 0.0
  %v2046 = vld [vmem:[%s9] sm:$0x7]
  %v2047 = vld [vmem:[%s10] sm:$0x1]
  %v2049 = vperm.slane %v2047, 0
  %v2052 = vsel %vm578, %v1983, 0
  %v2055 = vsel %vm578, %v1984, 0
  %v2058 = vsel %vm578, %v1985, 0
  %v2061 = vsel %vm578, %v1986, 0
  %v2064 = vsel %vm578, %v1987, 0
  %v2067 = vsel %vm578, %v1988, 0
  %v2070 = vsel %vm578, %v1989, 0
  %v2073 = vsel %vm578, %v1990, 0
  %v2076 = vsel %vm578, %v1991, 0
  %v2079 = vsel %vm578, %v1992, 0
  %v2082 = vsel %vm578, %v1993, 0
  %v2085 = vsel %vm578, %v1994, 0
  %v2088 = vsel %vm578, %v1995, 0
  %v2091 = vsel %vm578, %v1996, 0
  %v2094 = vsel %vm578, %v1997, 0
  %v2097 = vsel %vm578, %v1998, 0
  %v2100 = vsel %vm578, %v1999, 0
  %v2103 = vsel %vm578, %v2000, 0
  %v2106 = vsel %vm578, %v2001, 0
  %v2109 = vsel %vm578, %v2002, 0
  %v2112 = vsel %vm578, %v2003, 0
  %v2115 = vsel %vm578, %v2004, 0
  %v2118 = vsel %vm578, %v2005, 0
  %v2121 = vsel %vm578, %v2006, 0
  %v2124 = vsel %vm578, %v2007, 0
  %v2127 = vsel %vm578, %v2008, 0
  %v2130 = vsel %vm578, %v2009, 0
  %v2133 = vsel %vm578, %v2010, 0
  %v2136 = vsel %vm578, %v2011, 0
  %v2139 = vsel %vm578, %v2012, 0
  %v2142 = vsel %vm578, %v2013, 0
  %v2145 = vsel %vm578, %v2014, 0
  %v2148 = vsel %vm578, %v2015, 0
  %v2151 = vsel %vm578, %v2016, 0
  %v2154 = vsel %vm578, %v2017, 0
  %v2157 = vsel %vm578, %v2018, 0
  %v2160 = vsel %vm578, %v2019, 0
  %v2163 = vsel %vm578, %v2020, 0
  %v2166 = vsel %vm578, %v2021, 0
  %v2169 = vsel %vm578, %v2022, 0
  %v2172 = vsel %vm578, %v2023, 0
  %v2175 = vsel %vm578, %v2024, 0
  %v2178 = vsel %vm578, %v2025, 0
  %v2181 = vsel %vm578, %v2026, 0
  %v2184 = vsel %vm578, %v2027, 0
  %v2187 = vsel %vm578, %v2028, 0
  %v2190 = vsel %vm578, %v2029, 0
  %v2193 = vsel %vm578, %v2030, 0
  %v2196 = vsel %vm578, %v2031, 0
  %v2199 = vsel %vm578, %v2032, 0
  %v2202 = vsel %vm578, %v2033, 0
  %v2205 = vsel %vm578, %v2034, 0
  %v2208 = vsel %vm578, %v2035, 0
  %v2211 = vsel %vm578, %v2036, 0
  %v2214 = vsel %vm578, %v2037, 0
  %v2217 = vsel %vm578, %v2038, 0
  %v2220 = vsel %vm578, %v2039, 0
  %v2223 = vsel %vm578, %v2040, 0
  %v2226 = vsel %vm578, %v2041, 0
  %v2229 = vsel %vm578, %v2042, 0
  %v2232 = vsel %vm578, %v2043, 0
  %v2235 = vsel %vm578, %v2044, 0
  %v2238 = vsel %vm578, %v2045, 0
  %v2241 = vsel %vm578, %v2046, 0
  %2243 = vmatpush.xpose.msra.mxu0 0.0
  %2244 = vmatpush.xpose.msra.mxu0 0.0
  %2245 = vmatpush.xpose.msra.mxu0 0.0
  %2246 = vmatpush.xpose.msra.mxu0 0.0
  %2247 = vmatpush.xpose.msra.mxu0 0.0
  %2248 = vmatpush.xpose.msra.mxu0 0.0
  %2249 = vmatpush.xpose.msra.mxu0 0.0
  %2250 = vmatpush.xpose.msra.mxu0 0.0
  %2251 = vmatpush.xpose.msra.mxu0 0.0
  %2252 = vmatpush.xpose.msra.mxu0 0.0
  %2253 = vmatpush.xpose.msra.mxu0 0.0
  %2254 = vmatpush.xpose.msra.mxu0 0.0
  %2255 = vmatpush.xpose.msra.mxu0 0.0
  %2256 = vmatpush.xpose.msra.mxu0 0.0
  %2257 = vmatpush.xpose.msra.mxu0 0.0
  %2258 = vmatpush.xpose.msra.mxu0 %v2241
  %2259 = vmatmul.f32.gmra.mxu0 %v2052
  %v2260 = vpop.f32.mrf.mxu0
  %v2261 = vadd.f32 %v2049, %v2260
  %2262 = vmatmul.f32.gmra.mxu0 %v2055
  %v2263 = vpop.f32.mrf.mxu0
  %v2264 = vadd.f32 %v2049, %v2263
  %2265 = vmatmul.f32.gmra.mxu0 %v2058
  %v2266 = vpop.f32.mrf.mxu0
  %v2267 = vadd.f32 %v2049, %v2266
  %2268 = vmatmul.f32.gmra.mxu0 %v2061
  %v2269 = vpop.f32.mrf.mxu0
  %v2270 = vadd.f32 %v2049, %v2269
  %2271 = vmatmul.f32.gmra.mxu0 %v2064
  %v2272 = vpop.f32.mrf.mxu0
  %v2273 = vadd.f32 %v2049, %v2272
  %2274 = vmatmul.f32.gmra.mxu0 %v2067
  %v2275 = vpop.f32.mrf.mxu0
  %v2276 = vadd.f32 %v2049, %v2275
  %2277 = vmatmul.f32.gmra.mxu0 %v2070
  %v2278 = vpop.f32.mrf.mxu0
  %v2279 = vadd.f32 %v2049, %v2278
  %2280 = vmatmul.f32.gmra.mxu0 %v2073
  %v2281 = vpop.f32.mrf.mxu0
  %v2282 = vadd.f32 %v2049, %v2281
  %2283 = vmatmul.f32.gmra.mxu0 %v2076
  %v2284 = vpop.f32.mrf.mxu0
  %v2285 = vadd.f32 %v2049, %v2284
  %2286 = vmatmul.f32.gmra.mxu0 %v2079
  %v2287 = vpop.f32.mrf.mxu0
  %v2288 = vadd.f32 %v2049, %v2287
  %2289 = vmatmul.f32.gmra.mxu0 %v2082
  %v2290 = vpop.f32.mrf.mxu0
  %v2291 = vadd.f32 %v2049, %v2290
  %2292 = vmatmul.f32.gmra.mxu0 %v2085
  %v2293 = vpop.f32.mrf.mxu0
  %v2294 = vadd.f32 %v2049, %v2293
  %2295 = vmatmul.f32.gmra.mxu0 %v2088
  %v2296 = vpop.f32.mrf.mxu0
  %v2297 = vadd.f32 %v2049, %v2296
  %2298 = vmatmul.f32.gmra.mxu0 %v2091
  %v2299 = vpop.f32.mrf.mxu0
  %v2300 = vadd.f32 %v2049, %v2299
  %2301 = vmatmul.f32.gmra.mxu0 %v2094
  %v2302 = vpop.f32.mrf.mxu0
  %v2303 = vadd.f32 %v2049, %v2302
  %2304 = vmatmul.f32.gmra.mxu0 %v2097
  %v2305 = vpop.f32.mrf.mxu0
  %v2306 = vadd.f32 %v2049, %v2305
  %2307 = vmatmul.f32.gmra.mxu0 %v2100
  %v2308 = vpop.f32.mrf.mxu0
  %v2309 = vadd.f32 %v2049, %v2308
  %2310 = vmatmul.f32.gmra.mxu0 %v2103
  %v2311 = vpop.f32.mrf.mxu0
  %v2312 = vadd.f32 %v2049, %v2311
  %2313 = vmatmul.f32.gmra.mxu0 %v2106
  %v2314 = vpop.f32.mrf.mxu0
  %v2315 = vadd.f32 %v2049, %v2314
  %2316 = vmatmul.f32.gmra.mxu0 %v2109
  %v2317 = vpop.f32.mrf.mxu0
  %v2318 = vadd.f32 %v2049, %v2317
  %2319 = vmatmul.f32.gmra.mxu0 %v2112
  %v2320 = vpop.f32.mrf.mxu0
  %v2321 = vadd.f32 %v2049, %v2320
  %2322 = vmatmul.f32.gmra.mxu0 %v2115
  %v2323 = vpop.f32.mrf.mxu0
  %v2324 = vadd.f32 %v2049, %v2323
  %2325 = vmatmul.f32.gmra.mxu0 %v2118
  %v2326 = vpop.f32.mrf.mxu0
  %v2327 = vadd.f32 %v2049, %v2326
  %2328 = vmatmul.f32.gmra.mxu0 %v2121
  %v2329 = vpop.f32.mrf.mxu0
  %v2330 = vadd.f32 %v2049, %v2329
  %2331 = vmatmul.f32.gmra.mxu0 %v2124
  %v2332 = vpop.f32.mrf.mxu0
  %v2333 = vadd.f32 %v2049, %v2332
  %2334 = vmatmul.f32.gmra.mxu0 %v2127
  %v2335 = vpop.f32.mrf.mxu0
  %v2336 = vadd.f32 %v2049, %v2335
  %2337 = vmatmul.f32.gmra.mxu0 %v2130
  %v2338 = vpop.f32.mrf.mxu0
  %v2339 = vadd.f32 %v2049, %v2338
  %2340 = vmatmul.f32.gmra.mxu0 %v2133
  %v2341 = vpop.f32.mrf.mxu0
  %v2342 = vadd.f32 %v2049, %v2341
  %2343 = vmatmul.f32.gmra.mxu0 %v2136
  %v2344 = vpop.f32.mrf.mxu0
  %v2345 = vadd.f32 %v2049, %v2344
  %2346 = vmatmul.f32.gmra.mxu0 %v2139
  %v2347 = vpop.f32.mrf.mxu0
  %v2348 = vadd.f32 %v2049, %v2347
  %2349 = vmatmul.f32.gmra.mxu0 %v2142
  %v2350 = vpop.f32.mrf.mxu0
  %v2351 = vadd.f32 %v2049, %v2350
  %2352 = vmatmul.f32.gmra.mxu0 %v2145
  %v2353 = vpop.f32.mrf.mxu0
  %v2354 = vadd.f32 %v2049, %v2353
  %2355 = vmatmul.f32.gmra.mxu0 %v2148
  %v2356 = vpop.f32.mrf.mxu0
  %v2357 = vadd.f32 %v2049, %v2356
  %2358 = vmatmul.f32.gmra.mxu0 %v2151
  %v2359 = vpop.f32.mrf.mxu0
  %v2360 = vadd.f32 %v2049, %v2359
  %2361 = vmatmul.f32.gmra.mxu0 %v2154
  %v2362 = vpop.f32.mrf.mxu0
  %v2363 = vadd.f32 %v2049, %v2362
  %2364 = vmatmul.f32.gmra.mxu0 %v2157
  %v2365 = vpop.f32.mrf.mxu0
  %v2366 = vadd.f32 %v2049, %v2365
  %2367 = vmatmul.f32.gmra.mxu0 %v2160
  %v2368 = vpop.f32.mrf.mxu0
  %v2369 = vadd.f32 %v2049, %v2368
  %2370 = vmatmul.f32.gmra.mxu0 %v2163
  %v2371 = vpop.f32.mrf.mxu0
  %v2372 = vadd.f32 %v2049, %v2371
  %2373 = vmatmul.f32.gmra.mxu0 %v2166
  %v2374 = vpop.f32.mrf.mxu0
  %v2375 = vadd.f32 %v2049, %v2374
  %2376 = vmatmul.f32.gmra.mxu0 %v2169
  %v2377 = vpop.f32.mrf.mxu0
  %v2378 = vadd.f32 %v2049, %v2377
  %2379 = vmatmul.f32.gmra.mxu0 %v2172
  %v2380 = vpop.f32.mrf.mxu0
  %v2381 = vadd.f32 %v2049, %v2380
  %2382 = vmatmul.f32.gmra.mxu0 %v2175
  %v2383 = vpop.f32.mrf.mxu0
  %v2384 = vadd.f32 %v2049, %v2383
  %2385 = vmatmul.f32.gmra.mxu0 %v2178
  %v2386 = vpop.f32.mrf.mxu0
  %v2387 = vadd.f32 %v2049, %v2386
  %2388 = vmatmul.f32.gmra.mxu0 %v2181
  %v2389 = vpop.f32.mrf.mxu0
  %v2390 = vadd.f32 %v2049, %v2389
  %2391 = vmatmul.f32.gmra.mxu0 %v2184
  %v2392 = vpop.f32.mrf.mxu0
  %v2393 = vadd.f32 %v2049, %v2392
  %2394 = vmatmul.f32.gmra.mxu0 %v2187
  %v2395 = vpop.f32.mrf.mxu0
  %v2396 = vadd.f32 %v2049, %v2395
  %2397 = vmatmul.f32.gmra.mxu0 %v2190
  %v2398 = vpop.f32.mrf.mxu0
  %v2399 = vadd.f32 %v2049, %v2398
  %2400 = vmatmul.f32.gmra.mxu0 %v2193
  %v2401 = vpop.f32.mrf.mxu0
  %v2402 = vadd.f32 %v2049, %v2401
  %2403 = vmatmul.f32.gmra.mxu0 %v2196
  %v2404 = vpop.f32.mrf.mxu0
  %v2405 = vadd.f32 %v2049, %v2404
  %2406 = vmatmul.f32.gmra.mxu0 %v2199
  %v2407 = vpop.f32.mrf.mxu0
  %v2408 = vadd.f32 %v2049, %v2407
  %2409 = vmatmul.f32.gmra.mxu0 %v2202
  %v2410 = vpop.f32.mrf.mxu0
  %v2411 = vadd.f32 %v2049, %v2410
  %2412 = vmatmul.f32.gmra.mxu0 %v2205
  %v2413 = vpop.f32.mrf.mxu0
  %v2414 = vadd.f32 %v2049, %v2413
  %2415 = vmatmul.f32.gmra.mxu0 %v2208
  %v2416 = vpop.f32.mrf.mxu0
  %v2417 = vadd.f32 %v2049, %v2416
  %2418 = vmatmul.f32.gmra.mxu0 %v2211
  %v2419 = vpop.f32.mrf.mxu0
  %v2420 = vadd.f32 %v2049, %v2419
  %2421 = vmatmul.f32.gmra.mxu0 %v2214
  %v2422 = vpop.f32.mrf.mxu0
  %v2423 = vadd.f32 %v2049, %v2422
  %2424 = vmatmul.f32.gmra.mxu0 %v2217
  %v2425 = vpop.f32.mrf.mxu0
  %v2426 = vadd.f32 %v2049, %v2425
  %2427 = vmatmul.f32.gmra.mxu0 %v2220
  %v2428 = vpop.f32.mrf.mxu0
  %v2429 = vadd.f32 %v2049, %v2428
  %2430 = vmatmul.f32.gmra.mxu0 %v2223
  %v2431 = vpop.f32.mrf.mxu0
  %v2432 = vadd.f32 %v2049, %v2431
  %2433 = vmatmul.f32.gmra.mxu0 %v2226
  %v2434 = vpop.f32.mrf.mxu0
  %v2435 = vadd.f32 %v2049, %v2434
  %2436 = vmatmul.f32.gmra.mxu0 %v2229
  %v2437 = vpop.f32.mrf.mxu0
  %v2438 = vadd.f32 %v2049, %v2437
  %2439 = vmatmul.f32.gmra.mxu0 %v2232
  %v2440 = vpop.f32.mrf.mxu0
  %v2441 = vadd.f32 %v2049, %v2440
  %2442 = vmatmul.f32.gmra.mxu0 %v2235
  %v2443 = vpop.f32.mrf.mxu0
  %v2444 = vadd.f32 %v2049, %v2443
  %2445 = vmatmul.f32.gmra.mxu0 %v2238
  %v2446 = vpop.f32.mrf.mxu0
  %v2447 = vadd.f32 %v2049, %v2446
  %2448 = vdwg.mxu0
  %vm2449 = vcmask 23552
  %2450 = vst.msk [vmem:[%s11] sm:$0xff] %vm2449, %v2261
  %2451 = vst.msk [vmem:[%s11 + $0x8] sm:$0xff] %vm2449, %v2264
  %2452 = vst.msk [vmem:[%s11 + $0x10] sm:$0xff] %vm2449, %v2267
  %2453 = vst.msk [vmem:[%s11 + $0x18] sm:$0xff] %vm2449, %v2270
  %2454 = vst.msk [vmem:[%s11 + $0x20] sm:$0xff] %vm2449, %v2273
  %2455 = vst.msk [vmem:[%s11 + $0x28] sm:$0xff] %vm2449, %v2276
  %2456 = vst.msk [vmem:[%s11 + $0x30] sm:$0xff] %vm2449, %v2279
  %2457 = vst.msk [vmem:[%s11 + $0x38] sm:$0xff] %vm2449, %v2282
  %2458 = vst.msk [vmem:[%s11 + $0x40] sm:$0xff] %vm2449, %v2285
  %2459 = vst.msk [vmem:[%s11 + $0x48] sm:$0xff] %vm2449, %v2288
  %2460 = vst.msk [vmem:[%s11 + $0x50] sm:$0xff] %vm2449, %v2291
  %2461 = vst.msk [vmem:[%s11 + $0x58] sm:$0xff] %vm2449, %v2294
  %2462 = vst.msk [vmem:[%s11 + $0x60] sm:$0xff] %vm2449, %v2297
  %2463 = vst.msk [vmem:[%s11 + $0x68] sm:$0xff] %vm2449, %v2300
  %2464 = vst.msk [vmem:[%s11 + $0x70] sm:$0xff] %vm2449, %v2303
  %2465 = vst.msk [vmem:[%s11 + $0x78] sm:$0xff] %vm2449, %v2306
  %2466 = vst.msk [vmem:[%s11 + $0x80] sm:$0xff] %vm2449, %v2309
  %2467 = vst.msk [vmem:[%s11 + $0x88] sm:$0xff] %vm2449, %v2312
  %2468 = vst.msk [vmem:[%s11 + $0x90] sm:$0xff] %vm2449, %v2315
  %2469 = vst.msk [vmem:[%s11 + $0x98] sm:$0xff] %vm2449, %v2318
  %2470 = vst.msk [vmem:[%s11 + $0xa0] sm:$0xff] %vm2449, %v2321
  %2471 = vst.msk [vmem:[%s11 + $0xa8] sm:$0xff] %vm2449, %v2324
  %2472 = vst.msk [vmem:[%s11 + $0xb0] sm:$0xff] %vm2449, %v2327
  %2473 = vst.msk [vmem:[%s11 + $0xb8] sm:$0xff] %vm2449, %v2330
  %2474 = vst.msk [vmem:[%s11 + $0xc0] sm:$0xff] %vm2449, %v2333
  %2475 = vst.msk [vmem:[%s11 + $0xc8] sm:$0xff] %vm2449, %v2336
  %2476 = vst.msk [vmem:[%s11 + $0xd0] sm:$0xff] %vm2449, %v2339
  %2477 = vst.msk [vmem:[%s11 + $0xd8] sm:$0xff] %vm2449, %v2342
  %2478 = vst.msk [vmem:[%s11 + $0xe0] sm:$0xff] %vm2449, %v2345
  %2479 = vst.msk [vmem:[%s11 + $0xe8] sm:$0xff] %vm2449, %v2348
  %2480 = vst.msk [vmem:[%s11 + $0xf0] sm:$0xff] %vm2449, %v2351
  %2481 = vst.msk [vmem:[%s11 + $0xf8] sm:$0xff] %vm2449, %v2354
  %2482 = vst.msk [vmem:[%s11 + $0x100] sm:$0xff] %vm2449, %v2357
  %2483 = vst.msk [vmem:[%s11 + $0x108] sm:$0xff] %vm2449, %v2360
  %2484 = vst.msk [vmem:[%s11 + $0x110] sm:$0xff] %vm2449, %v2363
  %2485 = vst.msk [vmem:[%s11 + $0x118] sm:$0xff] %vm2449, %v2366
  %2486 = vst.msk [vmem:[%s11 + $0x120] sm:$0xff] %vm2449, %v2369
  %2487 = vst.msk [vmem:[%s11 + $0x128] sm:$0xff] %vm2449, %v2372
  %2488 = vst.msk [vmem:[%s11 + $0x130] sm:$0xff] %vm2449, %v2375
  %2489 = vst.msk [vmem:[%s11 + $0x138] sm:$0xff] %vm2449, %v2378
  %2490 = vst.msk [vmem:[%s11 + $0x140] sm:$0xff] %vm2449, %v2381
  %2491 = vst.msk [vmem:[%s11 + $0x148] sm:$0xff] %vm2449, %v2384
  %2492 = vst.msk [vmem:[%s11 + $0x150] sm:$0xff] %vm2449, %v2387
  %2493 = vst.msk [vmem:[%s11 + $0x158] sm:$0xff] %vm2449, %v2390
  %2494 = vst.msk [vmem:[%s11 + $0x160] sm:$0xff] %vm2449, %v2393
  %2495 = vst.msk [vmem:[%s11 + $0x168] sm:$0xff] %vm2449, %v2396
  %2496 = vst.msk [vmem:[%s11 + $0x170] sm:$0xff] %vm2449, %v2399
  %2497 = vst.msk [vmem:[%s11 + $0x178] sm:$0xff] %vm2449, %v2402
  %2498 = vst.msk [vmem:[%s11 + $0x180] sm:$0xff] %vm2449, %v2405
  %2499 = vst.msk [vmem:[%s11 + $0x188] sm:$0xff] %vm2449, %v2408
  %2500 = vst.msk [vmem:[%s11 + $0x190] sm:$0xff] %vm2449, %v2411
  %2501 = vst.msk [vmem:[%s11 + $0x198] sm:$0xff] %vm2449, %v2414
  %2502 = vst.msk [vmem:[%s11 + $0x1a0] sm:$0xff] %vm2449, %v2417
  %2503 = vst.msk [vmem:[%s11 + $0x1a8] sm:$0xff] %vm2449, %v2420
  %2504 = vst.msk [vmem:[%s11 + $0x1b0] sm:$0xff] %vm2449, %v2423
  %2505 = vst.msk [vmem:[%s11 + $0x1b8] sm:$0xff] %vm2449, %v2426
  %2506 = vst.msk [vmem:[%s11 + $0x1c0] sm:$0xff] %vm2449, %v2429
  %2507 = vst.msk [vmem:[%s11 + $0x1c8] sm:$0xff] %vm2449, %v2432
  %2508 = vst.msk [vmem:[%s11 + $0x1d0] sm:$0xff] %vm2449, %v2435
  %2509 = vst.msk [vmem:[%s11 + $0x1d8] sm:$0xff] %vm2449, %v2438
  %2510 = vst.msk [vmem:[%s11 + $0x1e0] sm:$0xff] %vm2449, %v2441
  %2511 = vst.msk [vmem:[%s11 + $0x1e8] sm:$0xff] %vm2449, %v2444
  %vm2512 = vcmask 19456
  %2513 = vst.msk [vmem:[%s11 + $0x1f0] sm:$0xf] %vm2512, %v2447
  // Predicated region
  $region46: #{conditional_transform.1} parent=0 // pred_check
    _
  $region47: #{conditional_transform.1} parent=0 // pred_check_branch
    %2515 = sbr.rel (0) target = $region49
  $region48: #{conditional_transform.1} parent=0 // pred_region
    _
  $region49: #{conditional_transform.1} parent=0 // pred_fallthru
    _
  // Predicated region
  $region50: #{conditional_transform.1} parent=0 // pred_check
    _
  $region51: #{conditional_transform.1} parent=0 // pred_check_branch
    %2517 = sbr.rel (0) target = $region53
  $region52: #{conditional_transform.1} parent=0 // pred_region
    _
  $region53: #{conditional_transform.1} parent=0 // pred_fallthru
    _

</llo_original>
